<compile_context>
chip_gen: v5e
topology: v5e:2x2
jax: 0.10.0
libtpu: 0.0.40
codegen_flags: <defaults>
</compile_context>

<pallas_src>
import functools

import jax
import jax.numpy as jnp
from jax import lax
from jax.experimental import pallas as pl
from jax.experimental.pallas import tpu as pltpu


# ------------------------------ helpers ----------------------------------- #

def _round_up(x, m):
    return ((x + m - 1) // m) * m


def _vmem_capacity_bytes():
    try:
        cap = getattr(pltpu.get_tpu_info(), "vmem_capacity_bytes", None)
        if cap:
            return int(cap)
    except Exception:
        pass
    return 64 * 1024 * 1024      # conservative: v7x physical VMEM per TensorCore


def _geometry(H, W, cin_p, cout_p, in_bytes, out_bytes, n_batch):
    """Shared canonical-layout geometry for both convs of the block."""
    wp = W + 2                                   # 1 left pad + W + >=1 right pad
    Lc = (H + 2) * wp                            # canonical (padded) flat length
    halo = _round_up(wp + 1, 128)                # max |tap shift| = wp + 1

    vmem_cap = _vmem_capacity_bytes()
    budget = min(vmem_cap // 3, 40 * 1024 * 1024)
    per_lane = (2 * cin_p * in_bytes             # current input tile (dbl-buffered)
                + 2 * cout_p * out_bytes         # output tile (dbl-buffered)
                + 9 * cin_p * in_bytes           # im2col taps scratch
                + 2 * 4)                         # mask row (f32, dbl-buffered)
    fixed = (4 * cin_p * halo * in_bytes         # two halo blocks, dbl-buffered
             + 2 * cout_p * 9 * cin_p * in_bytes # fused weights (resident)
             + 2 * cout_p * 4)                   # bias

    pt = max(halo, ((budget - fixed) // (per_lane * halo)) * halo)
    pt = min(pt, _round_up(Lc, halo))            # never bigger than the image
    if n_batch == 1 and Lc > halo:               # >=2 spatial tiles for v7x's 2 TCs
        pt = min(pt, ((Lc - 1) // halo) * halo)

    R = -(-Lc // pt)                             # data tiles per image
    hb = pt // halo
    Lbuf = (R + 2) * pt                          # lead pad tile + R data tiles + tail

    est = per_lane * pt + fixed
    vmem_limit = int(min(max(est + (8 << 20), 32 << 20),
                         max(vmem_cap - (4 << 20), 32 << 20)))
    return dict(wp=wp, Lc=Lc, halo=halo, pt=pt, hb=hb, R=R, Lbuf=Lbuf,
                vmem_limit=vmem_limit)


# ----------------------------- Pallas kernel ------------------------------ #

def _conv3x3_bias_relu_kernel(xp_ref, xc_ref, xn_ref, w_ref, b_ref, msk_ref,
                              o_ref, taps_ref, *, wp, halo):
    """One (image, spatial-tile) step: 3x3 conv (scale-folded) + bias + ReLU + mask.

    xp_ref  : (1, Cinp, halo)   lanes just before the current tile (prev halo)
    xc_ref  : (1, Cinp, PT)     current tile of the canonical padded layout
    xn_ref  : (1, Cinp, halo)   lanes just after the current tile (next halo)
    w_ref   : (Coutp, 9*Cinp)   conv weight with BN scale folded in
    b_ref   : (Coutp, 1)        folded BN bias (f32)
    msk_ref : (1, PT)           1.0 at real output positions, 0.0 at pad positions
    o_ref   : (1, Coutp, PT)    output tile (same canonical layout as the input)
    taps_ref: (9*Cinp, PT)      im2col scratch
    """
    cinp = xc_ref.shape[1]
    pt = xc_ref.shape[2]
    for t in range(9):                           # static unroll over the 3x3 taps
        kh, kw = divmod(t, 3)
        d = (kh - 1) * wp + (kw - 1)             # lane shift in [-(wp+1), wp+1]
        r0, r1 = t * cinp, (t + 1) * cinp        # sublane-aligned row block
        if d == 0:
            taps_ref[r0:r1, :] = xc_ref[0]
        elif d < 0:
            sh = -d
            taps_ref[r0:r1, :sh] = xp_ref[0, :, halo - sh:]
            taps_ref[r0:r1, sh:] = xc_ref[0, :, :pt - sh]
        else:
            taps_ref[r0:r1, :pt - d] = xc_ref[0, :, d:]
            taps_ref[r0:r1, pt - d:] = xn_ref[0, :, :d]
    # Single fused K = 9*Cinp matmul on the MXU, f32 accumulation.
    acc = jnp.dot(w_ref[...], taps_ref[...], preferred_element_type=jnp.float32)
    y = jnp.maximum(acc + b_ref[...], 0.0) * msk_ref[...]   # bias + ReLU + pad mask
    o_ref[0] = y.astype(o_ref.dtype)


def _conv3x3_bn_relu_padded(xbuf, w_fused, bias, mask, geo, *, cinp, coutp,
                            compute_dtype, out_dtype):
    """Conv3x3+BN+ReLU on the canonical padded layout; output in the same layout."""
    N = xbuf.shape[0]
    wp, halo, pt, hb, R, Lbuf = (geo["wp"], geo["halo"], geo["pt"], geo["hb"],
                                 geo["R"], geo["Lbuf"])
    kernel = functools.partial(_conv3x3_bias_relu_kernel, wp=wp, halo=halo)
    return pl.pallas_call(
        kernel,
        out_shape=jax.ShapeDtypeStruct((N, coutp, Lbuf), out_dtype),
        grid_spec=pltpu.PrefetchScalarGridSpec(
            num_scalar_prefetch=0,
            grid=(N, R),
            in_specs=[
                # prev halo / current tile / next halo of the flattened layout
                pl.BlockSpec((1, cinp, halo), lambda n, r: (n, 0, (r + 1) * hb - 1)),
                pl.BlockSpec((1, cinp, pt), lambda n, r: (n, 0, r + 1)),
                pl.BlockSpec((1, cinp, halo), lambda n, r: (n, 0, (r + 2) * hb)),
                # weights / bias: constant index map -> fetched once, VMEM resident
                pl.BlockSpec((coutp, 9 * cinp), lambda n, r: (0, 0)),
                pl.BlockSpec((coutp, 1), lambda n, r: (0, 0)),
                # per-lane validity mask for this tile
                pl.BlockSpec((1, pt), lambda n, r: (0, r + 1)),
            ],
            out_specs=pl.BlockSpec((1, coutp, pt), lambda n, r: (n, 0, r + 1)),
            scratch_shapes=[pltpu.VMEM((9 * cinp, pt), compute_dtype)],
        ),
        compiler_params=pltpu.CompilerParams(
            dimension_semantics=("parallel", "parallel"),
            vmem_limit_bytes=geo["vmem_limit"]),
    )(xbuf, xbuf, xbuf, w_fused, bias, mask)


# ------------------------------ JAX glue ---------------------------------- #

def _bilinear_matrix(out_size, in_size):
    """Row-stochastic interpolation matrix matching F.interpolate(align_corners=False)."""
    o = jnp.arange(out_size, dtype=jnp.float32)
    src = jnp.clip((o + 0.5) * (in_size / out_size) - 0.5, 0.0, in_size - 1.0)
    i0 = jnp.minimum(jnp.floor(src).astype(jnp.int32), in_size - 1)
    i1 = jnp.minimum(i0 + 1, in_size - 1)
    w1 = src - i0.astype(jnp.float32)
    oi = jnp.arange(out_size)
    m = jnp.zeros((out_size, in_size), jnp.float32)
    m = m.at[oi, i0].add(1.0 - w1)
    m = m.at[oi, i1].add(w1)
    return m


def _upsample_bilinear_matmul(x, out_h, out_w):
    """Separable bilinear resize as two small matmuls (MXU-friendly, no gathers)."""
    mh = _bilinear_matrix(out_h, x.shape[2])
    mw = _bilinear_matrix(out_w, x.shape[3])
    hi = jax.lax.Precision.HIGHEST
    y = jnp.einsum("oh,nchw->ncow", mh, x, precision=hi)
    return jnp.einsum("pw,ncow->ncop", mw, y, precision=hi)


def init_decoder_block(key, in_channels, out_channels):
    keys = jax.random.split(key, 10)

    def conv_params(kw_, kg, kb, km, kv, cin, cout):
        w_oihw = 0.1 * jax.random.normal(kw_, (cout, cin, 3, 3), jnp.float32)
        gamma = 1.0 + 0.1 * jax.random.normal(kg, (cout,), jnp.float32)
        beta = 0.1 * jax.random.normal(kb, (cout,), jnp.float32)
        mean = 0.1 * jax.random.normal(km, (cout,), jnp.float32)
        var = 0.5 + jnp.abs(jax.random.normal(kv, (cout,), jnp.float32))
        return dict(w_oihw=w_oihw, gamma=gamma, beta=beta, mean=mean, var=var,
                    eps=1e-5)

    return dict(conv1=conv_params(*keys[0:5], in_channels, out_channels),
                conv2=conv_params(*keys[5:10], out_channels, out_channels))


def decoder_block_forward(params, x_nchw, skip_nchw=None, *,
                          compute_dtype=jnp.float32):
    # Bilinear upsample (+ optional skip concat).
    if skip_nchw is not None:
        x = _upsample_bilinear_matmul(x_nchw, skip_nchw.shape[2], skip_nchw.shape[3])
        x = jnp.concatenate([x, skip_nchw], axis=1)
    else:
        x = _upsample_bilinear_matmul(x_nchw, 2 * x_nchw.shape[2], 2 * x_nchw.shape[3])

    N, Cin, H, W = x.shape
    c1, c2 = params["conv1"], params["conv2"]
    Cout = c1["w_oihw"].shape[0]

    sub = 16 if jnp.dtype(compute_dtype).itemsize == 2 else 8
    cinp = _round_up(Cin, sub)
    coutp = _round_up(Cout, sub)
    in_bytes = jnp.dtype(compute_dtype).itemsize
    geo = _geometry(H, W, max(cinp, coutp), coutp, in_bytes, 4, N)
    wp, Lc, pt, Lbuf = geo["wp"], geo["Lc"], geo["pt"], geo["Lbuf"]

    # Canonical layout for conv1's input: 1-px spatial zero pad (+ lane-friendly
    # right pad), channels padded to the sublane tile, rows flattened, one leading
    # tile of zeros so every tile's backward halo is in-bounds.
    xcan = jnp.pad(x.astype(compute_dtype),
                   ((0, 0), (0, cinp - Cin), (1, 1), (1, wp - W - 1)))
    xbuf = jnp.pad(xcan.reshape(N, cinp, Lc),
                   ((0, 0), (0, 0), (pt, Lbuf - pt - Lc)))

    # {0,1} mask of real (non-pad) output positions in the canonical layout.
    rows_ok = (jnp.arange(H + 2) >= 1) & (jnp.arange(H + 2) <= H)
    cols_ok = (jnp.arange(wp) >= 1) & (jnp.arange(wp) <= W)
    mask2d = (rows_ok[:, None] & cols_ok[None, :]).astype(jnp.float32)
    mask = jnp.pad(mask2d.reshape(1, Lc), ((0, 0), (pt, Lbuf - pt - Lc)))

    def fold(p, cin_logical, cin_pad):
        scale = p["gamma"] * lax.rsqrt(p["var"] + p["eps"])
        bias = p["beta"] - p["mean"] * scale
        w = p["w_oihw"] * scale[:, None, None, None]       # BN scale folded in
        w = jnp.transpose(w, (0, 2, 3, 1))                 # (Cout, 3, 3, Cin)
        w = jnp.pad(w, ((0, coutp - w.shape[0]), (0, 0), (0, 0),
                        (0, cin_pad - cin_logical)))
        w_fused = w.reshape(coutp, 9 * cin_pad).astype(compute_dtype)
        b = jnp.pad(bias, (0, coutp - bias.shape[0])).reshape(coutp, 1)
        return w_fused, b.astype(jnp.float32)

    w1, b1 = fold(c1, Cin, cinp)
    w2, b2 = fold(c2, Cout, coutp)

    # conv1: intermediate stays in compute_dtype AND in the canonical layout.
    ybuf = _conv3x3_bn_relu_padded(xbuf, w1, b1, mask, geo, cinp=cinp, coutp=coutp,
                                   compute_dtype=compute_dtype,
                                   out_dtype=compute_dtype)
    # conv2 consumes conv1's output buffer directly (no slice / re-pad round trip).
    zbuf = _conv3x3_bn_relu_padded(ybuf, w2, b2, mask, geo, cinp=coutp, coutp=coutp,
                                   compute_dtype=compute_dtype,
                                   out_dtype=jnp.float32)
    # Single final slice back to NCHW.
    z = zbuf[:, :Cout, pt:pt + Lc].reshape(N, Cout, H + 2, wp)
    return z[:, :, 1:H + 1, 1:W + 1]


# ---------------------------- pure-JAX reference --------------------------- #

def _upsample_bilinear_gather(x, out_h, out_w):
    N, C, H, W = x.shape

    def idx_weights(out_size, in_size):
        o = jnp.arange(out_size, dtype=jnp.float32)
        src = jnp.maximum((o + 0.5) * (in_size / out_size) - 0.5, 0.0)
        i0 = jnp.minimum(jnp.floor(src).astype(jnp.int32), in_size - 1)
        i1 = jnp.minimum(i0 + 1, in_size - 1)
        w1 = src - i0.astype(jnp.float32)
        return i0, i1, 1.0 - w1, w1

    h0, h1, wh0, wh1 = idx_weights(out_h, H)
    w0, w1, ww0, ww1 = idx_weights(out_w, W)
    xh = (x[:, :, h0, :] * wh0[None, None, :, None]
          + x[:, :, h1, :] * wh1[None, None, :, None])
    return xh[:, :, :, w0] * ww0 + xh[:, :, :, w1] * ww1


def _ref_conv_bn_relu(x, p):
    scale = p["gamma"] * lax.rsqrt(p["var"] + p["eps"])
    bias = p["beta"] - p["mean"] * scale
    y = lax.conv_general_dilated(x, p["w_oihw"], (1, 1), ((1, 1), (1, 1)),
                                 dimension_numbers=("NCHW", "OIHW", "NCHW"))
    y = y * scale.reshape(1, -1, 1, 1) + bias.reshape(1, -1, 1, 1)
    return jnp.maximum(y, 0.0)


def decoder_block_reference(params, x_nchw, skip_nchw=None):
    if skip_nchw is not None:
        x = _upsample_bilinear_gather(x_nchw, skip_nchw.shape[2], skip_nchw.shape[3])
        x = jnp.concatenate([x, skip_nchw], axis=1)
    else:
        x = _upsample_bilinear_gather(x_nchw, 2 * x_nchw.shape[2], 2 * x_nchw.shape[3])
    x = _ref_conv_bn_relu(x, params["conv1"])
    return _ref_conv_bn_relu(x, params["conv2"])


if __name__ == "__main__":
    key = jax.random.PRNGKey(0)
    k_param, k_param2, k_x, k_skip = jax.random.split(key, 4)
    in_channels, out_channels = 4, 8

    params = init_decoder_block(k_param, in_channels, out_channels)
    x = jax.random.normal(k_x, (2, in_channels, 16, 16), jnp.float32)   # NCHW

    # --- no-skip path, f32 storage ---
    fwd_f32 = jax.jit(functools.partial(decoder_block_forward,
                                        compute_dtype=jnp.float32))
    out = jax.block_until_ready(fwd_f32(params, x))
    assert out.shape == (2, out_channels, 32, 32), out.shape
    ref = decoder_block_reference(params, x)
    max_err = float(jnp.max(jnp.abs(out - ref)))
    assert max_err < 2e-4, f"f32 max abs error {max_err}"

    # --- no-skip path, bf16 storage (incl. bf16 intermediate), f32 accumulation ---
    fwd_bf16 = jax.jit(functools.partial(decoder_block_forward,
                                         compute_dtype=jnp.bfloat16))
    out16 = jax.block_until_ready(fwd_bf16(params, x))
    max_err16 = float(jnp.max(jnp.abs(out16 - ref)))
    assert max_err16 < 6e-2, f"bf16 max abs error {max_err16}"

    # --- skip path with ODD spatial size (exercises odd-H/W geometry) ---
    skip_channels = 6
    params2 = init_decoder_block(k_param2, in_channels + skip_channels, out_channels)
    skip = jax.random.normal(k_skip, (2, skip_channels, 31, 33), jnp.float32)
    out_s = jax.block_until_ready(jax.jit(decoder_block_forward)(params2, x, skip))
    assert out_s.shape == (2, out_channels, 31, 33), out_s.shape
    ref_s = decoder_block_reference(params2, x, skip)
    max_err_s = float(jnp.max(jnp.abs(out_s - ref_s)))
    assert max_err_s < 2e-4, f"skip-path max abs error {max_err_s}"

    print("KERNEL_OK")
</pallas_src>

<mosaic_0001>
module attributes {stable_mosaic.version = 11 : i64} {
  func.func @_conv3x3_bias_relu_kernel(%arg0: i32, %arg1: i32, %arg2: memref<1x8x128xf32, #tpu.memory_space<vmem>>, %arg3: memref<1x8x1280xf32, #tpu.memory_space<vmem>>, %arg4: memref<1x8x128xf32, #tpu.memory_space<vmem>>, %arg5: memref<8x72xf32, #tpu.memory_space<vmem>>, %arg6: memref<8x1xf32, #tpu.memory_space<vmem>>, %arg7: memref<1x1280xf32, #tpu.memory_space<vmem>>, %arg8: memref<1x8x1280xf32, #tpu.memory_space<vmem>>, %arg9: memref<72x1280xf32, #tpu.memory_space<vmem>>) attributes {dimension_semantics = [#tpu.dimension_semantics<parallel>, #tpu.dimension_semantics<parallel>], iteration_bounds = array<i64: 2, 1>, scalar_prefetch = 0 : i64, scratch_operands = 1 : i64, tpu.core_type = #tpu.core_type<tc>, window_params = [{transform_indices = @transform_0, window_bounds = array<i64: 1, 8, 128>}, {transform_indices = @transform_1, window_bounds = array<i64: 1, 8, 1280>}, {transform_indices = @transform_2, window_bounds = array<i64: 1, 8, 128>}, {pipeline_mode = #tpu.pipeline_mode<synchronous>, transform_indices = @transform_3, window_bounds = array<i64: 8, 72>}, {pipeline_mode = #tpu.pipeline_mode<synchronous>, transform_indices = @transform_4, window_bounds = array<i64: 8, 1>}, {transform_indices = @transform_5, window_bounds = array<i64: 1, 1280>}, {transform_indices = @transform_6, window_bounds = array<i64: 1, 8, 1280>}]} {
    %c0 = arith.constant 0 : index
    %c0_0 = arith.constant 0 : index
    %c93 = arith.constant 93 : index
    %0 = vector.load %arg2[%c0, %c0_0, %c93] : memref<1x8x128xf32, #tpu.memory_space<vmem>>, vector<1x8x35xf32>
    %1 = vector.shape_cast %0 : vector<1x8x35xf32> to vector<8x35xf32>
    %c0_1 = arith.constant 0 : index
    %c0_2 = arith.constant 0 : index
    %2 = vector.load %arg9[%c0_1, %c0_2] : memref<72x1280xf32, #tpu.memory_space<vmem>>, vector<8x35xf32>
    tpu.vector_store %arg9[%c0_1, %c0_2], %1 {strides = array<i32>} : memref<72x1280xf32, #tpu.memory_space<vmem>>, vector<8x35xf32>,
    %c0_3 = arith.constant 0 : index
    %c0_4 = arith.constant 0 : index
    %c0_5 = arith.constant 0 : index
    %3 = vector.load %arg3[%c0_3, %c0_4, %c0_5] : memref<1x8x1280xf32, #tpu.memory_space<vmem>>, vector<1x8x1245xf32>
    %4 = vector.shape_cast %3 : vector<1x8x1245xf32> to vector<8x1245xf32>
    %c0_6 = arith.constant 0 : index
    %c35 = arith.constant 35 : index
    %5 = vector.load %arg9[%c0_6, %c35] : memref<72x1280xf32, #tpu.memory_space<vmem>>, vector<8x1245xf32>
    tpu.vector_store %arg9[%c0_6, %c35], %4 {strides = array<i32>} : memref<72x1280xf32, #tpu.memory_space<vmem>>, vector<8x1245xf32>,
    %c0_7 = arith.constant 0 : index
    %c0_8 = arith.constant 0 : index
    %c94 = arith.constant 94 : index
    %6 = vector.load %arg2[%c0_7, %c0_8, %c94] : memref<1x8x128xf32, #tpu.memory_space<vmem>>, vector<1x8x34xf32>
    %7 = vector.shape_cast %6 : vector<1x8x34xf32> to vector<8x34xf32>
    %c8 = arith.constant 8 : index
    %c0_9 = arith.constant 0 : index
    %8 = vector.load %arg9[%c8, %c0_9] : memref<72x1280xf32, #tpu.memory_space<vmem>>, vector<8x34xf32>
    tpu.vector_store %arg9[%c8, %c0_9], %7 {strides = array<i32>} : memref<72x1280xf32, #tpu.memory_space<vmem>>, vector<8x34xf32>,
    %c0_10 = arith.constant 0 : index
    %c0_11 = arith.constant 0 : index
    %c0_12 = arith.constant 0 : index
    %9 = vector.load %arg3[%c0_10, %c0_11, %c0_12] : memref<1x8x1280xf32, #tpu.memory_space<vmem>>, vector<1x8x1246xf32>
    %10 = vector.shape_cast %9 : vector<1x8x1246xf32> to vector<8x1246xf32>
    %c8_13 = arith.constant 8 : index
    %c34 = arith.constant 34 : index
    %11 = vector.load %arg9[%c8_13, %c34] : memref<72x1280xf32, #tpu.memory_space<vmem>>, vector<8x1246xf32>
    tpu.vector_store %arg9[%c8_13, %c34], %10 {strides = array<i32>} : memref<72x1280xf32, #tpu.memory_space<vmem>>, vector<8x1246xf32>,
    %c0_14 = arith.constant 0 : index
    %c0_15 = arith.constant 0 : index
    %c95 = arith.constant 95 : index
    %12 = vector.load %arg2[%c0_14, %c0_15, %c95] : memref<1x8x128xf32, #tpu.memory_space<vmem>>, vector<1x8x33xf32>
    %13 = vector.shape_cast %12 : vector<1x8x33xf32> to vector<8x33xf32>
    %c16 = arith.constant 16 : index
    %c0_16 = arith.constant 0 : index
    %14 = vector.load %arg9[%c16, %c0_16] : memref<72x1280xf32, #tpu.memory_space<vmem>>, vector<8x33xf32>
    tpu.vector_store %arg9[%c16, %c0_16], %13 {strides = array<i32>} : memref<72x1280xf32, #tpu.memory_space<vmem>>, vector<8x33xf32>,
    %c0_17 = arith.constant 0 : index
    %c0_18 = arith.constant 0 : index
    %c0_19 = arith.constant 0 : index
    %15 = vector.load %arg3[%c0_17, %c0_18, %c0_19] : memref<1x8x1280xf32, #tpu.memory_space<vmem>>, vector<1x8x1247xf32>
    %16 = vector.shape_cast %15 : vector<1x8x1247xf32> to vector<8x1247xf32>
    %c16_20 = arith.constant 16 : index
    %c33 = arith.constant 33 : index
    %17 = vector.load %arg9[%c16_20, %c33] : memref<72x1280xf32, #tpu.memory_space<vmem>>, vector<8x1247xf32>
    tpu.vector_store %arg9[%c16_20, %c33], %16 {strides = array<i32>} : memref<72x1280xf32, #tpu.memory_space<vmem>>, vector<8x1247xf32>,
    %c0_21 = arith.constant 0 : index
    %c0_22 = arith.constant 0 : index
    %c127 = arith.constant 127 : index
    %18 = vector.load %arg2[%c0_21, %c0_22, %c127] : memref<1x8x128xf32, #tpu.memory_space<vmem>>, vector<1x8x1xf32>
    %19 = vector.shape_cast %18 : vector<1x8x1xf32> to vector<8x1xf32>
    %c24 = arith.constant 24 : index
    %c0_23 = arith.constant 0 : index
    %20 = vector.load %arg9[%c24, %c0_23] : memref<72x1280xf32, #tpu.memory_space<vmem>>, vector<8x1xf32>
    tpu.vector_store %arg9[%c24, %c0_23], %19 {strides = array<i32>} : memref<72x1280xf32, #tpu.memory_space<vmem>>, vector<8x1xf32>,
    %c0_24 = arith.constant 0 : index
    %c0_25 = arith.constant 0 : index
    %c0_26 = arith.constant 0 : index
    %21 = vector.load %arg3[%c0_24, %c0_25, %c0_26] : memref<1x8x1280xf32, #tpu.memory_space<vmem>>, vector<1x8x1279xf32>
    %22 = vector.shape_cast %21 : vector<1x8x1279xf32> to vector<8x1279xf32>
    %c24_27 = arith.constant 24 : index
    %c1 = arith.constant 1 : index
    %23 = vector.load %arg9[%c24_27, %c1] : memref<72x1280xf32, #tpu.memory_space<vmem>>, vector<8x1279xf32>
    tpu.vector_store %arg9[%c24_27, %c1], %22 {strides = array<i32>} : memref<72x1280xf32, #tpu.memory_space<vmem>>, vector<8x1279xf32>,
    %c0_28 = arith.constant 0 : index
    %c0_29 = arith.constant 0 : index
    %c0_30 = arith.constant 0 : index
    %24 = vector.load %arg3[%c0_28, %c0_29, %c0_30] : memref<1x8x1280xf32, #tpu.memory_space<vmem>>, vector<1x8x1280xf32>
    %25 = vector.shape_cast %24 : vector<1x8x1280xf32> to vector<8x1280xf32>
    %c32 = arith.constant 32 : index
    %c0_31 = arith.constant 0 : index
    %26 = vector.load %arg9[%c32, %c0_31] : memref<72x1280xf32, #tpu.memory_space<vmem>>, vector<8x1280xf32>
    tpu.vector_store %arg9[%c32, %c0_31], %25 {strides = array<i32>} : memref<72x1280xf32, #tpu.memory_space<vmem>>, vector<8x1280xf32>,
    %c0_32 = arith.constant 0 : index
    %c0_33 = arith.constant 0 : index
    %c1_34 = arith.constant 1 : index
    %27 = vector.load %arg3[%c0_32, %c0_33, %c1_34] : memref<1x8x1280xf32, #tpu.memory_space<vmem>>, vector<1x8x1279xf32>
    %28 = vector.shape_cast %27 : vector<1x8x1279xf32> to vector<8x1279xf32>
    %c40 = arith.constant 40 : index
    %c0_35 = arith.constant 0 : index
    %29 = vector.load %arg9[%c40, %c0_35] : memref<72x1280xf32, #tpu.memory_space<vmem>>, vector<8x1279xf32>
    tpu.vector_store %arg9[%c40, %c0_35], %28 {strides = array<i32>} : memref<72x1280xf32, #tpu.memory_space<vmem>>, vector<8x1279xf32>,
    %c0_36 = arith.constant 0 : index
    %c0_37 = arith.constant 0 : index
    %c0_38 = arith.constant 0 : index
    %30 = vector.load %arg4[%c0_36, %c0_37, %c0_38] : memref<1x8x128xf32, #tpu.memory_space<vmem>>, vector<1x8x1xf32>
    %31 = vector.shape_cast %30 : vector<1x8x1xf32> to vector<8x1xf32>
    %c40_39 = arith.constant 40 : index
    %c1279 = arith.constant 1279 : index
    %32 = vector.load %arg9[%c40_39, %c1279] : memref<72x1280xf32, #tpu.memory_space<vmem>>, vector<8x1xf32>
    tpu.vector_store %arg9[%c40_39, %c1279], %31 {strides = array<i32>} : memref<72x1280xf32, #tpu.memory_space<vmem>>, vector<8x1xf32>,
    %c0_40 = arith.constant 0 : index
    %c0_41 = arith.constant 0 : index
    %c33_42 = arith.constant 33 : index
    %33 = vector.load %arg3[%c0_40, %c0_41, %c33_42] : memref<1x8x1280xf32, #tpu.memory_space<vmem>>, vector<1x8x1247xf32>
    %34 = vector.shape_cast %33 : vector<1x8x1247xf32> to vector<8x1247xf32>
    %c48 = arith.constant 48 : index
    %c0_43 = arith.constant 0 : index
    %35 = vector.load %arg9[%c48, %c0_43] : memref<72x1280xf32, #tpu.memory_space<vmem>>, vector<8x1247xf32>
    tpu.vector_store %arg9[%c48, %c0_43], %34 {strides = array<i32>} : memref<72x1280xf32, #tpu.memory_space<vmem>>, vector<8x1247xf32>,
    %c0_44 = arith.constant 0 : index
    %c0_45 = arith.constant 0 : index
    %c0_46 = arith.constant 0 : index
    %36 = vector.load %arg4[%c0_44, %c0_45, %c0_46] : memref<1x8x128xf32, #tpu.memory_space<vmem>>, vector<1x8x33xf32>
    %37 = vector.shape_cast %36 : vector<1x8x33xf32> to vector<8x33xf32>
    %c48_47 = arith.constant 48 : index
    %c1247 = arith.constant 1247 : index
    %38 = vector.load %arg9[%c48_47, %c1247] : memref<72x1280xf32, #tpu.memory_space<vmem>>, vector<8x33xf32>
    tpu.vector_store %arg9[%c48_47, %c1247], %37 {strides = array<i32>} : memref<72x1280xf32, #tpu.memory_space<vmem>>, vector<8x33xf32>,
    %c0_48 = arith.constant 0 : index
    %c0_49 = arith.constant 0 : index
    %c34_50 = arith.constant 34 : index
    %39 = vector.load %arg3[%c0_48, %c0_49, %c34_50] : memref<1x8x1280xf32, #tpu.memory_space<vmem>>, vector<1x8x1246xf32>
    %40 = vector.shape_cast %39 : vector<1x8x1246xf32> to vector<8x1246xf32>
    %c56 = arith.constant 56 : index
    %c0_51 = arith.constant 0 : index
    %41 = vector.load %arg9[%c56, %c0_51] : memref<72x1280xf32, #tpu.memory_space<vmem>>, vector<8x1246xf32>
    tpu.vector_store %arg9[%c56, %c0_51], %40 {strides = array<i32>} : memref<72x1280xf32, #tpu.memory_space<vmem>>, vector<8x1246xf32>,
    %c0_52 = arith.constant 0 : index
    %c0_53 = arith.constant 0 : index
    %c0_54 = arith.constant 0 : index
    %42 = vector.load %arg4[%c0_52, %c0_53, %c0_54] : memref<1x8x128xf32, #tpu.memory_space<vmem>>, vector<1x8x34xf32>
    %43 = vector.shape_cast %42 : vector<1x8x34xf32> to vector<8x34xf32>
    %c56_55 = arith.constant 56 : index
    %c1246 = arith.constant 1246 : index
    %44 = vector.load %arg9[%c56_55, %c1246] : memref<72x1280xf32, #tpu.memory_space<vmem>>, vector<8x34xf32>
    tpu.vector_store %arg9[%c56_55, %c1246], %43 {strides = array<i32>} : memref<72x1280xf32, #tpu.memory_space<vmem>>, vector<8x34xf32>,
    %c0_56 = arith.constant 0 : index
    %c0_57 = arith.constant 0 : index
    %c35_58 = arith.constant 35 : index
    %45 = vector.load %arg3[%c0_56, %c0_57, %c35_58] : memref<1x8x1280xf32, #tpu.memory_space<vmem>>, vector<1x8x1245xf32>
    %46 = vector.shape_cast %45 : vector<1x8x1245xf32> to vector<8x1245xf32>
    %c64 = arith.constant 64 : index
    %c0_59 = arith.constant 0 : index
    %47 = vector.load %arg9[%c64, %c0_59] : memref<72x1280xf32, #tpu.memory_space<vmem>>, vector<8x1245xf32>
    tpu.vector_store %arg9[%c64, %c0_59], %46 {strides = array<i32>} : memref<72x1280xf32, #tpu.memory_space<vmem>>, vector<8x1245xf32>,
    %c0_60 = arith.constant 0 : index
    %c0_61 = arith.constant 0 : index
    %c0_62 = arith.constant 0 : index
    %48 = vector.load %arg4[%c0_60, %c0_61, %c0_62] : memref<1x8x128xf32, #tpu.memory_space<vmem>>, vector<1x8x35xf32>
    %49 = vector.shape_cast %48 : vector<1x8x35xf32> to vector<8x35xf32>
    %c64_63 = arith.constant 64 : index
    %c1245 = arith.constant 1245 : index
    %50 = vector.load %arg9[%c64_63, %c1245] : memref<72x1280xf32, #tpu.memory_space<vmem>>, vector<8x35xf32>
    tpu.vector_store %arg9[%c64_63, %c1245], %49 {strides = array<i32>} : memref<72x1280xf32, #tpu.memory_space<vmem>>, vector<8x35xf32>,
    %c0_64 = arith.constant 0 : index
    %c0_65 = arith.constant 0 : index
    %51 = vector.load %arg5[%c0_64, %c0_65] : memref<8x72xf32, #tpu.memory_space<vmem>>, vector<8x72xf32>
    %c0_66 = arith.constant 0 : index
    %c0_67 = arith.constant 0 : index
    %52 = vector.load %arg9[%c0_66, %c0_67] : memref<72x1280xf32, #tpu.memory_space<vmem>>, vector<72x1280xf32>
    %cst = arith.constant dense<0.000000e+00> : vector<8x1280xf32>
    %53 = tpu.matmul %51, %52, %cst {dimension_numbers = #tpu.dot_dimension_numbers<[1], [0], [0], [1], [0, 0, 1, 1], [], []>} : vector<8x72xf32>, vector<72x1280xf32>, vector<8x1280xf32> -> vector<8x1280xf32>
    %c0_68 = arith.constant 0 : index
    %c0_69 = arith.constant 0 : index
    %54 = vector.load %arg6[%c0_68, %c0_69] : memref<8x1xf32, #tpu.memory_space<vmem>>, vector<8x1xf32>
    %55 = vector.broadcast %54 : vector<8x1xf32> to vector<8x1280xf32>
    %56 = arith.addf %53, %55 : vector<8x1280xf32>
    %cst_70 = arith.constant 0.000000e+00 : f32
    %57 = vector.broadcast %cst_70 : f32 to vector<8x1280xf32>
    %58 = arith.maximumf %56, %57 : vector<8x1280xf32>
    %c0_71 = arith.constant 0 : index
    %c0_72 = arith.constant 0 : index
    %59 = vector.load %arg7[%c0_71, %c0_72] : memref<1x1280xf32, #tpu.memory_space<vmem>>, vector<1x1280xf32>
    %60 = vector.broadcast %59 : vector<1x1280xf32> to vector<8x1280xf32>
    %61 = arith.mulf %58, %60 : vector<8x1280xf32>
    %c0_73 = arith.constant 0 : index
    %c0_74 = arith.constant 0 : index
    %c0_75 = arith.constant 0 : index
    %62 = vector.load %arg8[%c0_73, %c0_74, %c0_75] : memref<1x8x1280xf32, #tpu.memory_space<vmem>>, vector<1x8x1280xf32>
    %63 = vector.shape_cast %62 : vector<1x8x1280xf32> to vector<8x1280xf32>
    %64 = vector.shape_cast %61 : vector<8x1280xf32> to vector<1x8x1280xf32>
    tpu.vector_store %arg8[%c0_73, %c0_74, %c0_75], %64 {strides = array<i32>} : memref<1x8x1280xf32, #tpu.memory_space<vmem>>, vector<1x8x1280xf32>,
    return
  }
  func.func @transform_0(%arg0: i32, %arg1: i32) -> (i32, i32, i32) {
    %c1_i32 = arith.constant 1 : i32
    %0 = arith.addi %arg1, %c1_i32 : i32
    %c10_i32 = arith.constant 10 : i32
    %1 = arith.muli %0, %c10_i32 : i32
    %c1_i32_0 = arith.constant 1 : i32
    %2 = arith.subi %1, %c1_i32_0 : i32
    %c0_i32 = arith.constant 0 : i32
    %c0_i32_1 = arith.constant 0 : i32
    return %arg0, %c0_i32, %2 : i32, i32, i32
  }
  func.func @transform_1(%arg0: i32, %arg1: i32) -> (i32, i32, i32) {
    %c1_i32 = arith.constant 1 : i32
    %0 = arith.addi %arg1, %c1_i32 : i32
    %c0_i32 = arith.constant 0 : i32
    %c0_i32_0 = arith.constant 0 : i32
    return %arg0, %c0_i32, %0 : i32, i32, i32
  }
  func.func @transform_2(%arg0: i32, %arg1: i32) -> (i32, i32, i32) {
    %c2_i32 = arith.constant 2 : i32
    %0 = arith.addi %arg1, %c2_i32 : i32
    %c10_i32 = arith.constant 10 : i32
    %1 = arith.muli %0, %c10_i32 : i32
    %c0_i32 = arith.constant 0 : i32
    %c0_i32_0 = arith.constant 0 : i32
    return %arg0, %c0_i32, %1 : i32, i32, i32
  }
  func.func @transform_3(%arg0: i32, %arg1: i32) -> (i32, i32) {
    %c0_i32 = arith.constant 0 : i32
    %c0_i32_0 = arith.constant 0 : i32
    %c0_i32_1 = arith.constant 0 : i32
    return %c0_i32, %c0_i32_0 : i32, i32
  }
  func.func @transform_4(%arg0: i32, %arg1: i32) -> (i32, i32) {
    %c0_i32 = arith.constant 0 : i32
    %c0_i32_0 = arith.constant 0 : i32
    %c0_i32_1 = arith.constant 0 : i32
    return %c0_i32, %c0_i32_0 : i32, i32
  }
  func.func @transform_5(%arg0: i32, %arg1: i32) -> (i32, i32) {
    %c1_i32 = arith.constant 1 : i32
    %0 = arith.addi %arg1, %c1_i32 : i32
    %c0_i32 = arith.constant 0 : i32
    %c0_i32_0 = arith.constant 0 : i32
    return %c0_i32, %0 : i32, i32
  }
  func.func @transform_6(%arg0: i32, %arg1: i32) -> (i32, i32, i32) {
    %c1_i32 = arith.constant 1 : i32
    %0 = arith.addi %arg1, %c1_i32 : i32
    %c0_i32 = arith.constant 0 : i32
    %c0_i32_0 = arith.constant 0 : i32
    return %arg0, %c0_i32, %0 : i32, i32, i32
  }
}

</mosaic_0001>

<llo_original>
// kernel: decoder_block_forward.2
$region0: #{decoder_block_forward.2}
  #allocation0 [shape = 'u32[]', space=smem, size = 0x4, offset = 0x4, fixed_abs, tag = 'smem constant byte address 0x4 - core index']
  #allocation1 [shape = 'u32[72,128]{1,0:T(1,128)}', space=vmem, size = 0x9000, scoped, tag = 'internal scratch']
  #allocation2 [shape = 'f32[72,1280]{1,0:T(8,128)}', space=vmem, size = 0x5a000, scoped, tag = 'scratch operand']
  %s0 = inlined_call_operand.vmem [shape: f32[2,8,3840], index: 0, kind: input, shape index: {}, may-alias: {0,1,2}]
  %s1 = inlined_call_operand.vmem [shape: f32[2,8,3840], index: 1, kind: input, shape index: {}, may-alias: {0,1,2}]
  %s2 = inlined_call_operand.vmem [shape: f32[2,8,3840], index: 2, kind: input, shape index: {}, may-alias: {0,1,2}]
  %s3 = inlined_call_operand.vmem [shape: f32[8,72], index: 3, kind: input, shape index: {}]
  %s4 = inlined_call_operand.vmem [shape: f32[8,1], index: 4, kind: input, shape index: {}]
  %s5 = inlined_call_operand.vmem [shape: f32[1,3840], index: 5, kind: input, shape index: {}]
  %s6 = inlined_call_operand.vmem [shape: f32[2,8,3840], index: 6, kind: output, shape index: {}]
  %s7 = sld [smem:[#allocation0]]
  $region57: #{decoder_block_forward.2} parent=0
    _
  %s9 = ssub.s32 1, %s7
  %s10 = scalar_select 0, %s9, %s7
  loop: start=0, step=1, limit=4
  $region2: #{decoder_block_forward.2} parent=0 // loop_pre_header
    _
  $region3: #{decoder_block_forward.2} parent=0 // loop_header
    %s12 = sphi 0, %s16
    %p13 = scmp.ge.s32.totalorder %s12, 4
    %s19 = sphi 0, %s31
    %s20 = sphi 0, %s27
    %s21 = sphi 0, %s19
    %s22 = sphi 0, %s20
    %s23 = sphi 0, %s21
    %s24 = sphi 0, %s22
    %s42 = sphi 0, %s44
    %s45 = sphi 0, %s42
    %s46 = sphi 0, %s45
    %s62 = sphi 0, %s46
    %s72 = sphi 0, %s74
    %s75 = sphi 0, %s72
    %s76 = sphi 0, %s75
    %s92 = sphi 0, %s76
    %s104 = sphi 0, %s106
    %s107 = sphi 0, %s104
    %s108 = sphi 0, %s107
    %s124 = sphi 0, %s108
    %s128 = sphi 0, %s128
    %s130 = sphi 0, %s128
    %s131 = sphi 0, %s130
    %s145 = sphi 0, %s131
    %s149 = sphi 0, %s149
    %s151 = sphi 0, %s149
    %s152 = sphi 0, %s151
    %s166 = sphi 0, %s152
    %s174 = sphi 0, %s176
    %s177 = sphi 0, %s174
    %s178 = sphi 0, %s177
    %s194 = sphi 0, %s178
    %s204 = sphi 0, %s206
    %s207 = sphi 0, %s204
    %s208 = sphi 0, %s207
    %s224 = sphi 0, %s208
  $region4: #{decoder_block_forward.2} parent=0 // loop_header_branch
    %15 = sbr.rel (%p13) target = $region8
  $region5: #{decoder_block_forward.2} parent=0 // loop_body
    %s17 = ssub.s32 %s12, 1
    %s18 = ssub.s32 %s12, 2
    %s25 = sadd.s32 1, %s20
    %p26 = scmp.ge.s32.totalorder %s25, 1
    %s27 = scalar_select %p26, 0, %s25
    %s28 = sadd.s32 1, %s19
    %s29 = scalar_select %p26, %s28, %s19
    %p30 = scmp.ge.s32.totalorder %s29, 2
    %s31 = scalar_select %p30, 0, %s29
    %s32 = sadd.s32 %s20, 1
    %s33 = smul.u32 %s32, 10
    %s34 = ssub.s32 %s33, 1
    %s35 = sadd.s32 %s27, 1
    %s36 = smul.u32 %s35, 10
    %s37 = ssub.s32 %s36, 1
    %s38 = ssub.s32 %s19, %s31
    %s39 = ssub.s32 %s34, %s37
    %s40 = sor.u32 %s38, %s39
    %p41 = scmp.eq.s32.totalorder %s40, 0
    %s43 = sadd.s32 %s42, 1
    %s44 = scalar_select %p41, %s42, %s43
    %p47 = pneg %p41
    %p48 = scmp.eq.s32.totalorder %s12, 1
    %p49 = por %p47, %p48
    %p50 = scmp.ne.s32.totalorder %s42, %s45
    %p51 = scmp.eq.s32.totalorder %s12, 0
    %p52 = por %p50, %p51
    %p53 = scmp.ne.s32.totalorder %s42, %s45
    %p54 = scmp.eq.s32.totalorder %s17, 1
    %p55 = por %p53, %p54
    %p56 = scmp.ne.s32.totalorder %s45, %s46
    %p57 = scmp.eq.s32.totalorder %s17, 0
    %p58 = por %p56, %p57
    %p59 = scmp.ne.s32.totalorder %s45, %s46
    %p60 = scmp.eq.s32.totalorder %s18, 1
    %p61 = por %p59, %p60
    %p63 = scmp.ne.s32.totalorder %s46, %s62
    %p64 = scmp.eq.s32.totalorder %s18, 0
    %p65 = por %p63, %p64
    %s66 = sadd.s32 %s20, 1
    %s67 = sadd.s32 %s27, 1
    %s68 = ssub.s32 %s19, %s31
    %s69 = ssub.s32 %s66, %s67
    %s70 = sor.u32 %s68, %s69
    %p71 = scmp.eq.s32.totalorder %s70, 0
    %s73 = sadd.s32 %s72, 1
    %s74 = scalar_select %p71, %s72, %s73
    %p77 = pneg %p71
    %p78 = scmp.eq.s32.totalorder %s12, 1
    %p79 = por %p77, %p78
    %p80 = scmp.ne.s32.totalorder %s72, %s75
    %p81 = scmp.eq.s32.totalorder %s12, 0
    %p82 = por %p80, %p81
    %p83 = scmp.ne.s32.totalorder %s72, %s75
    %p84 = scmp.eq.s32.totalorder %s17, 1
    %p85 = por %p83, %p84
    %p86 = scmp.ne.s32.totalorder %s75, %s76
    %p87 = scmp.eq.s32.totalorder %s17, 0
    %p88 = por %p86, %p87
    %p89 = scmp.ne.s32.totalorder %s75, %s76
    %p90 = scmp.eq.s32.totalorder %s18, 1
    %p91 = por %p89, %p90
    %p93 = scmp.ne.s32.totalorder %s76, %s92
    %p94 = scmp.eq.s32.totalorder %s18, 0
    %p95 = por %p93, %p94
    %s96 = sadd.s32 %s20, 2
    %s97 = smul.u32 %s96, 10
    %s98 = sadd.s32 %s27, 2
    %s99 = smul.u32 %s98, 10
    %s100 = ssub.s32 %s19, %s31
    %s101 = ssub.s32 %s97, %s99
    %s102 = sor.u32 %s100, %s101
    %p103 = scmp.eq.s32.totalorder %s102, 0
    %s105 = sadd.s32 %s104, 1
    %s106 = scalar_select %p103, %s104, %s105
    %p109 = pneg %p103
    %p110 = scmp.eq.s32.totalorder %s12, 1
    %p111 = por %p109, %p110
    %p112 = scmp.ne.s32.totalorder %s104, %s107
    %p113 = scmp.eq.s32.totalorder %s12, 0
    %p114 = por %p112, %p113
    %p115 = scmp.ne.s32.totalorder %s104, %s107
    %p116 = scmp.eq.s32.totalorder %s17, 1
    %p117 = por %p115, %p116
    %p118 = scmp.ne.s32.totalorder %s107, %s108
    %p119 = scmp.eq.s32.totalorder %s17, 0
    %p120 = por %p118, %p119
    %p121 = scmp.ne.s32.totalorder %s107, %s108
    %p122 = scmp.eq.s32.totalorder %s18, 1
    %p123 = por %p121, %p122
    %p125 = scmp.ne.s32.totalorder %s108, %s124
    %p126 = scmp.eq.s32.totalorder %s18, 0
    %p127 = por %p125, %p126
    %s129 = sadd.s32 %s128, 1
    %p132 = scmp.eq.s32.totalorder %s12, 1
    %p133 = scmp.ne.s32.totalorder %s128, %s130
    %p134 = scmp.eq.s32.totalorder %s12, 0
    %p135 = por %p133, %p134
    %p136 = scmp.ne.s32.totalorder %s128, %s130
    %p137 = scmp.eq.s32.totalorder %s17, 1
    %p138 = por %p136, %p137
    %p139 = scmp.ne.s32.totalorder %s130, %s131
    %p140 = scmp.eq.s32.totalorder %s17, 0
    %p141 = por %p139, %p140
    %p142 = scmp.ne.s32.totalorder %s130, %s131
    %p143 = scmp.eq.s32.totalorder %s18, 1
    %p144 = por %p142, %p143
    %p146 = scmp.ne.s32.totalorder %s131, %s145
    %p147 = scmp.eq.s32.totalorder %s18, 0
    %p148 = por %p146, %p147
    %s150 = sadd.s32 %s149, 1
    %p153 = scmp.eq.s32.totalorder %s12, 1
    %p154 = scmp.ne.s32.totalorder %s149, %s151
    %p155 = scmp.eq.s32.totalorder %s12, 0
    %p156 = por %p154, %p155
    %p157 = scmp.ne.s32.totalorder %s149, %s151
    %p158 = scmp.eq.s32.totalorder %s17, 1
    %p159 = por %p157, %p158
    %p160 = scmp.ne.s32.totalorder %s151, %s152
    %p161 = scmp.eq.s32.totalorder %s17, 0
    %p162 = por %p160, %p161
    %p163 = scmp.ne.s32.totalorder %s151, %s152
    %p164 = scmp.eq.s32.totalorder %s18, 1
    %p165 = por %p163, %p164
    %p167 = scmp.ne.s32.totalorder %s152, %s166
    %p168 = scmp.eq.s32.totalorder %s18, 0
    %p169 = por %p167, %p168
    %s170 = sadd.s32 %s20, 1
    %s171 = sadd.s32 %s27, 1
    %s172 = ssub.s32 %s170, %s171
    %p173 = scmp.eq.s32.totalorder %s172, 0
    %s175 = sadd.s32 %s174, 1
    %s176 = scalar_select %p173, %s174, %s175
    %p179 = pneg %p173
    %p180 = scmp.eq.s32.totalorder %s12, 1
    %p181 = por %p179, %p180
    %p182 = scmp.ne.s32.totalorder %s174, %s177
    %p183 = scmp.eq.s32.totalorder %s12, 0
    %p184 = por %p182, %p183
    %p185 = scmp.ne.s32.totalorder %s174, %s177
    %p186 = scmp.eq.s32.totalorder %s17, 1
    %p187 = por %p185, %p186
    %p188 = scmp.ne.s32.totalorder %s177, %s178
    %p189 = scmp.eq.s32.totalorder %s17, 0
    %p190 = por %p188, %p189
    %p191 = scmp.ne.s32.totalorder %s177, %s178
    %p192 = scmp.eq.s32.totalorder %s18, 1
    %p193 = por %p191, %p192
    %p195 = scmp.ne.s32.totalorder %s178, %s194
    %p196 = scmp.eq.s32.totalorder %s18, 0
    %p197 = por %p195, %p196
    %s198 = sadd.s32 %s20, 1
    %s199 = sadd.s32 %s27, 1
    %s200 = ssub.s32 %s19, %s31
    %s201 = ssub.s32 %s198, %s199
    %s202 = sor.u32 %s200, %s201
    %p203 = scmp.eq.s32.totalorder %s202, 0
    %s205 = sadd.s32 %s204, 1
    %s206 = scalar_select %p203, %s204, %s205
    %p209 = pneg %p203
    %p210 = scmp.eq.s32.totalorder %s12, 1
    %p211 = por %p209, %p210
    %p212 = scmp.ne.s32.totalorder %s204, %s207
    %p213 = scmp.eq.s32.totalorder %s12, 0
    %p214 = por %p212, %p213
    %p215 = scmp.ne.s32.totalorder %s204, %s207
    %p216 = scmp.eq.s32.totalorder %s17, 1
    %p217 = por %p215, %p216
    %p218 = scmp.ne.s32.totalorder %s207, %s208
    %p219 = scmp.eq.s32.totalorder %s17, 0
    %p220 = por %p218, %p219
    %p221 = scmp.ne.s32.totalorder %s207, %s208
    %p222 = scmp.eq.s32.totalorder %s18, 1
    %p223 = por %p221, %p222
    %p225 = scmp.ne.s32.totalorder %s208, %s224
    %p226 = scmp.eq.s32.totalorder %s18, 0
    %p227 = por %p225, %p226
    %p228 = scmp.le.s32.totalorder 1, %s12
    %p229 = scmp.lt.s32.totalorder %s12, 3
    %p230 = pnand %p228, %p229
    %p231 = pneg %p230
    // Predicated region
    $region9: #{decoder_block_forward.2} parent=5 // pred_check
      _
    $region10: #{decoder_block_forward.2} parent=5 // pred_check_branch
      %233 = sbr.rel (%p230) target = $region12
    $region11: #{decoder_block_forward.2} parent=5 // pred_region
      %s234 = ssub.s32 %s12, 1
      // Predicated region
      $region13: #{decoder_block_forward.2} parent=11 // pred_check
        %p235 = pneg %p141
      $region14: #{decoder_block_forward.2} parent=11 // pred_check_branch
        %237 = sbr.rel (%p235) target = $region16
      $region15: #{decoder_block_forward.2} parent=11 // pred_region
        _
      $region16: #{decoder_block_forward.2} parent=11 // pred_fallthru
        _
      // Predicated region
      $region17: #{decoder_block_forward.2} parent=11 // pred_check
        %p238 = pneg %p162
      $region18: #{decoder_block_forward.2} parent=11 // pred_check_branch
        %240 = sbr.rel (%p238) target = $region20
      $region19: #{decoder_block_forward.2} parent=11 // pred_region
        _
      $region20: #{decoder_block_forward.2} parent=11 // pred_fallthru
        _
      // Predicated region
      $region21: #{decoder_block_forward.2} parent=11 // pred_check
        %p241 = pneg %p190
      $region22: #{decoder_block_forward.2} parent=11 // pred_check_branch
        %243 = sbr.rel (%p241) target = $region24
      $region23: #{decoder_block_forward.2} parent=11 // pred_region
        %s244 = sadd.s32 %s22, 1
        %s245 = smul.u32 10, %s244
        %p246 = scmp.lt.s32.totalorder %s245, 29
        %s247 = scalar_select %p246, %s245, 29
        %s248 = scalar_lea.vmem %s5, %s247
        %s249 = sadd.s32 %s22, 1
        %s250 = smul.u32 10, %s249
      $region24: #{decoder_block_forward.2} parent=11 // pred_fallthru
        _
    $region12: #{decoder_block_forward.2} parent=5 // pred_fallthru
      _
    %p251 = scmp.lt.s32.totalorder %s12, 2
    // Predicated region
    $region25: #{decoder_block_forward.2} parent=5 // pred_check
      %p252 = pneg %p251
    $region26: #{decoder_block_forward.2} parent=5 // pred_check_branch
      %254 = sbr.rel (%p252) target = $region28
    $region27: #{decoder_block_forward.2} parent=5 // pred_region
      // Predicated region
      $region29: #{decoder_block_forward.2} parent=27 // pred_check
        %p255 = pneg %p52
      $region30: #{decoder_block_forward.2} parent=27 // pred_check_branch
        %257 = sbr.rel (%p255) target = $region32
      $region31: #{decoder_block_forward.2} parent=27 // pred_region
        %s258 = sadd.s32 %s20, 1
        %s259 = smul.u32 %s258, 10
        %s260 = ssub.s32 %s259, 1
        %p261 = scmp.lt.s32.totalorder %s19, 1
        %s262 = scalar_select %p261, %s19, 1
        %p263 = scmp.lt.s32.totalorder %s260, 29
        %s264 = scalar_select %p263, %s260, 29
        %s265 = smul.addr %s262, 30
        %s266 = sadd.s32 %s264, %s265
        %s267 = smul.addr %s266, 8
        %s268 = scalar_lea.vmem %s0, %s267
        %s269 = sadd.s32 %s20, 1
        %s270 = smul.u32 %s269, 10
        %s271 = ssub.s32 %s270, 1
      $region32: #{decoder_block_forward.2} parent=27 // pred_fallthru
        _
      // Predicated region
      $region33: #{decoder_block_forward.2} parent=27 // pred_check
        %p272 = pneg %p82
      $region34: #{decoder_block_forward.2} parent=27 // pred_check_branch
        %274 = sbr.rel (%p272) target = $region36
      $region35: #{decoder_block_forward.2} parent=27 // pred_region
        %s275 = sadd.s32 %s20, 1
        %s276 = smul.u32 10, %s275
        %p277 = scmp.lt.s32.totalorder %s19, 1
        %s278 = scalar_select %p277, %s19, 1
        %p279 = scmp.lt.s32.totalorder %s276, 29
        %s280 = scalar_select %p279, %s276, 29
        %s281 = smul.addr %s278, 30
        %s282 = sadd.s32 %s280, %s281
        %s283 = smul.addr %s282, 8
        %s284 = scalar_lea.vmem %s1, %s283
        %s285 = sadd.s32 %s20, 1
        %s286 = smul.u32 10, %s285
      $region36: #{decoder_block_forward.2} parent=27 // pred_fallthru
        _
      // Predicated region
      $region37: #{decoder_block_forward.2} parent=27 // pred_check
        %p287 = pneg %p114
      $region38: #{decoder_block_forward.2} parent=27 // pred_check_branch
        %289 = sbr.rel (%p287) target = $region40
      $region39: #{decoder_block_forward.2} parent=27 // pred_region
        %s290 = sadd.s32 %s20, 2
        %s291 = smul.u32 %s290, 10
        %p292 = scmp.lt.s32.totalorder %s19, 1
        %s293 = scalar_select %p292, %s19, 1
        %p294 = scmp.lt.s32.totalorder %s291, 29
        %s295 = scalar_select %p294, %s291, 29
        %s296 = smul.addr %s293, 30
        %s297 = sadd.s32 %s295, %s296
        %s298 = smul.addr %s297, 8
        %s299 = scalar_lea.vmem %s2, %s298
        %s300 = sadd.s32 %s20, 2
        %s301 = smul.u32 %s300, 10
      $region40: #{decoder_block_forward.2} parent=27 // pred_fallthru
        _
    $region28: #{decoder_block_forward.2} parent=5 // pred_fallthru
      _
    %p302 = scmp.le.s32.totalorder 1, %s12
    %p303 = scmp.lt.s32.totalorder %s12, 3
    %p304 = pnand %p302, %p303
    %p305 = pneg %p304
    // Predicated region
    $region41: #{decoder_block_forward.2} parent=5 // pred_check
      _
    $region42: #{decoder_block_forward.2} parent=5 // pred_check_branch
      %307 = sbr.rel (%p304) target = $region44
    $region43: #{decoder_block_forward.2} parent=5 // pred_region
      %s308 = ssub.s32 %s12, 1
      %s309 = sadd.s32 %s22, 1
      %s310 = smul.u32 %s309, 10
      %s311 = ssub.s32 %s310, 1
      %p312 = scmp.lt.s32.totalorder %s21, 1
      %s313 = scalar_select %p312, %s21, 1
      %p314 = scmp.lt.s32.totalorder %s311, 29
      %s315 = scalar_select %p314, %s311, 29
      %s316 = smul.addr %s313, 30
      %s317 = sadd.s32 %s315, %s316
      %s318 = smul.addr %s317, 8
      %s319 = scalar_lea.vmem %s0, %s318
      %p320 = pneg %p58
      %p321 = pneg %p55
      %s322 = sadd.s32 %s22, 1
      %s323 = smul.u32 10, %s322
      %p324 = scmp.lt.s32.totalorder %s21, 1
      %s325 = scalar_select %p324, %s21, 1
      %p326 = scmp.lt.s32.totalorder %s323, 29
      %s327 = scalar_select %p326, %s323, 29
      %s328 = smul.addr %s325, 30
      %s329 = sadd.s32 %s327, %s328
      %s330 = smul.addr %s329, 8
      %s331 = scalar_lea.vmem %s1, %s330
      %p332 = pneg %p88
      %p333 = pneg %p85
      %s334 = sadd.s32 %s22, 2
      %s335 = smul.u32 %s334, 10
      %p336 = scmp.lt.s32.totalorder %s21, 1
      %s337 = scalar_select %p336, %s21, 1
      %p338 = scmp.lt.s32.totalorder %s335, 29
      %s339 = scalar_select %p338, %s335, 29
      %s340 = smul.addr %s337, 30
      %s341 = sadd.s32 %s339, %s340
      %s342 = smul.addr %s341, 8
      %s343 = scalar_lea.vmem %s2, %s342
      %p344 = pneg %p120
      %p345 = pneg %p117
      %p346 = pneg %p141
      %p347 = pneg %p138
      %p348 = pneg %p162
      %p349 = pneg %p159
      %s350 = sadd.s32 %s22, 1
      %s351 = smul.u32 10, %s350
      %p352 = scmp.lt.s32.totalorder %s351, 29
      %s353 = scalar_select %p352, %s351, 29
      %s354 = scalar_lea.vmem %s5, %s353
      %p355 = pneg %p190
      %p356 = pneg %p187
      %p357 = pneg %p220
      %p358 = pneg %p217
      %s359 = sadd.s32 %s22, 1
      %s360 = smul.u32 10, %s359
      %p361 = scmp.lt.s32.totalorder %s21, 1
      %s362 = scalar_select %p361, %s21, 1
      %p363 = scmp.lt.s32.totalorder %s360, 29
      %s364 = scalar_select %p363, %s360, 29
      %s365 = smul.addr %s362, 30
      %s366 = sadd.s32 %s364, %s365
      %s367 = smul.addr %s366, 8
      %s368 = scalar_lea.vmem %s6, %s367
      %s369 = sadd.s32 %s22, 1
      %s370 = smul.u32 %s369, 10
      %s371 = ssub.s32 %s370, 1
      %p372 = scmp.lt.s32.totalorder %s21, 1
      %s373 = scalar_select %p372, %s21, 1
      %p374 = scmp.lt.s32.totalorder %s371, 29
      %s375 = scalar_select %p374, %s371, 29
      %s376 = smul.addr %s373, 30
      %s377 = sadd.s32 %s375, %s376
      %s378 = smul.addr %s377, 8
      %s379 = scalar_lea.vmem %s0, %s378
      %s380 = sadd.s32 %s22, 1
      %s381 = smul.u32 %s380, 10
      %s382 = ssub.s32 %s381, 1
      %s383 = sadd.s32 %s22, 1
      %s384 = smul.u32 10, %s383
      %p385 = scmp.lt.s32.totalorder %s21, 1
      %s386 = scalar_select %p385, %s21, 1
      %p387 = scmp.lt.s32.totalorder %s384, 29
      %s388 = scalar_select %p387, %s384, 29
      %s389 = smul.addr %s386, 30
      %s390 = sadd.s32 %s388, %s389
      %s391 = smul.addr %s390, 8
      %s392 = scalar_lea.vmem %s1, %s391
      %s393 = sadd.s32 %s22, 1
      %s394 = smul.u32 10, %s393
      %s395 = sadd.s32 %s22, 2
      %s396 = smul.u32 %s395, 10
      %p397 = scmp.lt.s32.totalorder %s21, 1
      %s398 = scalar_select %p397, %s21, 1
      %p399 = scmp.lt.s32.totalorder %s396, 29
      %s400 = scalar_select %p399, %s396, 29
      %s401 = smul.addr %s398, 30
      %s402 = sadd.s32 %s400, %s401
      %s403 = smul.addr %s402, 8
      %s404 = scalar_lea.vmem %s2, %s403
      %s405 = sadd.s32 %s22, 2
      %s406 = smul.u32 %s405, 10
      %s407 = sadd.s32 %s22, 1
      %s408 = smul.u32 10, %s407
      %p409 = scmp.lt.s32.totalorder %s408, 29
      %s410 = scalar_select %p409, %s408, 29
      %s411 = scalar_lea.vmem %s5, %s410
      %s412 = sadd.s32 %s22, 1
      %s413 = smul.u32 10, %s412
      %s414 = sadd.s32 %s22, 1
      %s415 = smul.u32 10, %s414
      %p416 = scmp.lt.s32.totalorder %s21, 1
      %s417 = scalar_select %p416, %s21, 1
      %p418 = scmp.lt.s32.totalorder %s415, 29
      %s419 = scalar_select %p418, %s415, 29
      %s420 = smul.addr %s417, 30
      %s421 = sadd.s32 %s419, %s420
      %s422 = smul.addr %s421, 8
      %s423 = scalar_lea.vmem %s6, %s422
      %s424 = sadd.s32 %s22, 1
      %s425 = smul.u32 10, %s424
      %v426 = vld [vmem:[%s379] sm:$0xff]
      %428 = vrot.lane.b32.xlu0 %v426, 35
      %v429 = vpop.permute.xlu0 %428
      %vm431 = vcmask 285696
      %432 = vst.msk [vmem:[#allocation2] sm:$0xff] %vm431, %v429
      %v433 = vld [vmem:[%s392] sm:$0xff]
      %v434 = vld [vmem:[%s392 + $0x8] sm:$0xff]
      %v435 = vld [vmem:[%s392 + $0x10] sm:$0xff]
      %v436 = vld [vmem:[%s392 + $0x18] sm:$0xff]
      %v437 = vld [vmem:[%s392 + $0x20] sm:$0xff]
      %v438 = vld [vmem:[%s392 + $0x28] sm:$0xff]
      %v439 = vld [vmem:[%s392 + $0x30] sm:$0xff]
      %v440 = vld [vmem:[%s392 + $0x38] sm:$0xff]
      %v441 = vld [vmem:[%s392 + $0x40] sm:$0xff]
      %v442 = vld [vmem:[%s392 + $0x48] sm:$0xff]
      %453 = vrot.lane.b32.xlu0 %v433, 35
      %v454 = vpop.permute.xlu0 %453
      %455 = vrot.lane.b32.xlu0 %v434, 35
      %v456 = vpop.permute.xlu0 %455
      %457 = vrot.lane.b32.xlu0 %v435, 35
      %v458 = vpop.permute.xlu0 %457
      %459 = vrot.lane.b32.xlu0 %v436, 35
      %v460 = vpop.permute.xlu0 %459
      %461 = vrot.lane.b32.xlu0 %v437, 35
      %v462 = vpop.permute.xlu0 %461
      %463 = vrot.lane.b32.xlu0 %v438, 35
      %v464 = vpop.permute.xlu0 %463
      %465 = vrot.lane.b32.xlu0 %v439, 35
      %v466 = vpop.permute.xlu0 %465
      %467 = vrot.lane.b32.xlu0 %v440, 35
      %v468 = vpop.permute.xlu0 %467
      %469 = vrot.lane.b32.xlu0 %v441, 35
      %v470 = vpop.permute.xlu0 %469
      %471 = vrot.lane.b32.xlu0 %v442, 35
      %v472 = vpop.permute.xlu0 %471
      %v473 = vsel %vm431, %v454, %v456
      %v474 = vsel %vm431, %v456, %v458
      %v475 = vsel %vm431, %v458, %v460
      %v476 = vsel %vm431, %v460, %v462
      %v477 = vsel %vm431, %v462, %v464
      %v478 = vsel %vm431, %v464, %v466
      %v479 = vsel %vm431, %v466, %v468
      %v480 = vsel %vm431, %v468, %v470
      %v481 = vsel %vm431, %v470, %v472
      %vm492 = vcmask 1047832
      %493 = vst.msk [vmem:[#allocation2] sm:$0xff] %vm492, %v454
      %494 = vst [vmem:[#allocation2 + $0x8] sm:$0xff] %v473
      %495 = vst [vmem:[#allocation2 + $0x10] sm:$0xff] %v474
      %496 = vst [vmem:[#allocation2 + $0x18] sm:$0xff] %v475
      %497 = vst [vmem:[#allocation2 + $0x20] sm:$0xff] %v476
      %498 = vst [vmem:[#allocation2 + $0x28] sm:$0xff] %v477
      %499 = vst [vmem:[#allocation2 + $0x30] sm:$0xff] %v478
      %500 = vst [vmem:[#allocation2 + $0x38] sm:$0xff] %v479
      %501 = vst [vmem:[#allocation2 + $0x40] sm:$0xff] %v480
      %502 = vst [vmem:[#allocation2 + $0x48] sm:$0xff] %v481
      %v503 = vld [vmem:[%s379] sm:$0xff]
      %505 = vrot.lane.b32.xlu0 %v503, 34
      %v506 = vpop.permute.xlu0 %505
      %vm508 = vcmask 277504
      %509 = vst.msk [vmem:[#allocation2 + $0x50] sm:$0xff] %vm508, %v506
      %v510 = vld [vmem:[%s392] sm:$0xff]
      %v511 = vld [vmem:[%s392 + $0x8] sm:$0xff]
      %v512 = vld [vmem:[%s392 + $0x10] sm:$0xff]
      %v513 = vld [vmem:[%s392 + $0x18] sm:$0xff]
      %v514 = vld [vmem:[%s392 + $0x20] sm:$0xff]
      %v515 = vld [vmem:[%s392 + $0x28] sm:$0xff]
      %v516 = vld [vmem:[%s392 + $0x30] sm:$0xff]
      %v517 = vld [vmem:[%s392 + $0x38] sm:$0xff]
      %v518 = vld [vmem:[%s392 + $0x40] sm:$0xff]
      %v519 = vld [vmem:[%s392 + $0x48] sm:$0xff]
      %530 = vrot.lane.b32.xlu0 %v510, 34
      %v531 = vpop.permute.xlu0 %530
      %532 = vrot.lane.b32.xlu0 %v511, 34
      %v533 = vpop.permute.xlu0 %532
      %534 = vrot.lane.b32.xlu0 %v512, 34
      %v535 = vpop.permute.xlu0 %534
      %536 = vrot.lane.b32.xlu0 %v513, 34
      %v537 = vpop.permute.xlu0 %536
      %538 = vrot.lane.b32.xlu0 %v514, 34
      %v539 = vpop.permute.xlu0 %538
      %540 = vrot.lane.b32.xlu0 %v515, 34
      %v541 = vpop.permute.xlu0 %540
      %542 = vrot.lane.b32.xlu0 %v516, 34
      %v543 = vpop.permute.xlu0 %542
      %544 = vrot.lane.b32.xlu0 %v517, 34
      %v545 = vpop.permute.xlu0 %544
      %546 = vrot.lane.b32.xlu0 %v518, 34
      %v547 = vpop.permute.xlu0 %546
      %548 = vrot.lane.b32.xlu0 %v519, 34
      %v549 = vpop.permute.xlu0 %548
      %v550 = vsel %vm508, %v531, %v533
      %v551 = vsel %vm508, %v533, %v535
      %v552 = vsel %vm508, %v535, %v537
      %v553 = vsel %vm508, %v537, %v539
      %v554 = vsel %vm508, %v539, %v541
      %v555 = vsel %vm508, %v541, %v543
      %v556 = vsel %vm508, %v543, %v545
      %v557 = vsel %vm508, %v545, %v547
      %v558 = vsel %vm508, %v547, %v549
      %vm569 = vcmask 1047824
      %570 = vst.msk [vmem:[#allocation2 + $0x50] sm:$0xff] %vm569, %v531
      %571 = vst [vmem:[#allocation2 + $0x58] sm:$0xff] %v550
      %572 = vst [vmem:[#allocation2 + $0x60] sm:$0xff] %v551
      %573 = vst [vmem:[#allocation2 + $0x68] sm:$0xff] %v552
      %574 = vst [vmem:[#allocation2 + $0x70] sm:$0xff] %v553
      %575 = vst [vmem:[#allocation2 + $0x78] sm:$0xff] %v554
      %576 = vst [vmem:[#allocation2 + $0x80] sm:$0xff] %v555
      %577 = vst [vmem:[#allocation2 + $0x88] sm:$0xff] %v556
      %578 = vst [vmem:[#allocation2 + $0x90] sm:$0xff] %v557
      %579 = vst [vmem:[#allocation2 + $0x98] sm:$0xff] %v558
      %v580 = vld [vmem:[%s379] sm:$0xff]
      %582 = vrot.lane.b32.xlu0 %v580, 33
      %v583 = vpop.permute.xlu0 %582
      %vm585 = vcmask 269312
      %586 = vst.msk [vmem:[#allocation2 + $0xa0] sm:$0xff] %vm585, %v583
      %v587 = vld [vmem:[%s392] sm:$0xff]
      %v588 = vld [vmem:[%s392 + $0x8] sm:$0xff]
      %v589 = vld [vmem:[%s392 + $0x10] sm:$0xff]
      %v590 = vld [vmem:[%s392 + $0x18] sm:$0xff]
      %v591 = vld [vmem:[%s392 + $0x20] sm:$0xff]
      %v592 = vld [vmem:[%s392 + $0x28] sm:$0xff]
      %v593 = vld [vmem:[%s392 + $0x30] sm:$0xff]
      %v594 = vld [vmem:[%s392 + $0x38] sm:$0xff]
      %v595 = vld [vmem:[%s392 + $0x40] sm:$0xff]
      %v596 = vld [vmem:[%s392 + $0x48] sm:$0xff]
      %607 = vrot.lane.b32.xlu0 %v587, 33
      %v608 = vpop.permute.xlu0 %607
      %609 = vrot.lane.b32.xlu0 %v588, 33
      %v610 = vpop.permute.xlu0 %609
      %611 = vrot.lane.b32.xlu0 %v589, 33
      %v612 = vpop.permute.xlu0 %611
      %613 = vrot.lane.b32.xlu0 %v590, 33
      %v614 = vpop.permute.xlu0 %613
      %615 = vrot.lane.b32.xlu0 %v591, 33
      %v616 = vpop.permute.xlu0 %615
      %617 = vrot.lane.b32.xlu0 %v592, 33
      %v618 = vpop.permute.xlu0 %617
      %619 = vrot.lane.b32.xlu0 %v593, 33
      %v620 = vpop.permute.xlu0 %619
      %621 = vrot.lane.b32.xlu0 %v594, 33
      %v622 = vpop.permute.xlu0 %621
      %623 = vrot.lane.b32.xlu0 %v595, 33
      %v624 = vpop.permute.xlu0 %623
      %625 = vrot.lane.b32.xlu0 %v596, 33
      %v626 = vpop.permute.xlu0 %625
      %v627 = vsel %vm585, %v608, %v610
      %v628 = vsel %vm585, %v610, %v612
      %v629 = vsel %vm585, %v612, %v614
      %v630 = vsel %vm585, %v614, %v616
      %v631 = vsel %vm585, %v616, %v618
      %v632 = vsel %vm585, %v618, %v620
      %v633 = vsel %vm585, %v620, %v622
      %v634 = vsel %vm585, %v622, %v624
      %v635 = vsel %vm585, %v624, %v626
      %vm646 = vcmask 1047816
      %647 = vst.msk [vmem:[#allocation2 + $0xa0] sm:$0xff] %vm646, %v608
      %648 = vst [vmem:[#allocation2 + $0xa8] sm:$0xff] %v627
      %649 = vst [vmem:[#allocation2 + $0xb0] sm:$0xff] %v628
      %650 = vst [vmem:[#allocation2 + $0xb8] sm:$0xff] %v629
      %651 = vst [vmem:[#allocation2 + $0xc0] sm:$0xff] %v630
      %652 = vst [vmem:[#allocation2 + $0xc8] sm:$0xff] %v631
      %653 = vst [vmem:[#allocation2 + $0xd0] sm:$0xff] %v632
      %654 = vst [vmem:[#allocation2 + $0xd8] sm:$0xff] %v633
      %655 = vst [vmem:[#allocation2 + $0xe0] sm:$0xff] %v634
      %656 = vst [vmem:[#allocation2 + $0xe8] sm:$0xff] %v635
      %v657 = vld [vmem:[%s379] sm:$0xff]
      %659 = vrot.lane.b32.xlu0 %v657, 1
      %v660 = vpop.permute.xlu0 %659
      %vm662 = vcmask 7168
      %663 = vst.msk [vmem:[#allocation2 + $0xf0] sm:$0xff] %vm662, %v660
      %v664 = vld [vmem:[%s392] sm:$0xff]
      %v665 = vld [vmem:[%s392 + $0x8] sm:$0xff]
      %v666 = vld [vmem:[%s392 + $0x10] sm:$0xff]
      %v667 = vld [vmem:[%s392 + $0x18] sm:$0xff]
      %v668 = vld [vmem:[%s392 + $0x20] sm:$0xff]
      %v669 = vld [vmem:[%s392 + $0x28] sm:$0xff]
      %v670 = vld [vmem:[%s392 + $0x30] sm:$0xff]
      %v671 = vld [vmem:[%s392 + $0x38] sm:$0xff]
      %v672 = vld [vmem:[%s392 + $0x40] sm:$0xff]
      %v673 = vld [vmem:[%s392 + $0x48] sm:$0xff]
      %684 = vrot.lane.b32.xlu0 %v664, 1
      %v685 = vpop.permute.xlu0 %684
      %686 = vrot.lane.b32.xlu0 %v665, 1
      %v687 = vpop.permute.xlu0 %686
      %688 = vrot.lane.b32.xlu0 %v666, 1
      %v689 = vpop.permute.xlu0 %688
      %690 = vrot.lane.b32.xlu0 %v667, 1
      %v691 = vpop.permute.xlu0 %690
      %692 = vrot.lane.b32.xlu0 %v668, 1
      %v693 = vpop.permute.xlu0 %692
      %694 = vrot.lane.b32.xlu0 %v669, 1
      %v695 = vpop.permute.xlu0 %694
      %696 = vrot.lane.b32.xlu0 %v670, 1
      %v697 = vpop.permute.xlu0 %696
      %698 = vrot.lane.b32.xlu0 %v671, 1
      %v699 = vpop.permute.xlu0 %698
      %700 = vrot.lane.b32.xlu0 %v672, 1
      %v701 = vpop.permute.xlu0 %700
      %702 = vrot.lane.b32.xlu0 %v673, 1
      %v703 = vpop.permute.xlu0 %702
      %v704 = vsel %vm662, %v685, %v687
      %v705 = vsel %vm662, %v687, %v689
      %v706 = vsel %vm662, %v689, %v691
      %v707 = vsel %vm662, %v691, %v693
      %v708 = vsel %vm662, %v693, %v695
      %v709 = vsel %vm662, %v695, %v697
      %v710 = vsel %vm662, %v697, %v699
      %v711 = vsel %vm662, %v699, %v701
      %v712 = vsel %vm662, %v701, %v703
      %vm723 = vcmask 1047560
      %724 = vst.msk [vmem:[#allocation2 + $0xf0] sm:$0xff] %vm723, %v685
      %725 = vst [vmem:[#allocation2 + $0xf8] sm:$0xff] %v704
      %726 = vst [vmem:[#allocation2 + $0x100] sm:$0xff] %v705
      %727 = vst [vmem:[#allocation2 + $0x108] sm:$0xff] %v706
      %728 = vst [vmem:[#allocation2 + $0x110] sm:$0xff] %v707
      %729 = vst [vmem:[#allocation2 + $0x118] sm:$0xff] %v708
      %730 = vst [vmem:[#allocation2 + $0x120] sm:$0xff] %v709
      %731 = vst [vmem:[#allocation2 + $0x128] sm:$0xff] %v710
      %732 = vst [vmem:[#allocation2 + $0x130] sm:$0xff] %v711
      %733 = vst [vmem:[#allocation2 + $0x138] sm:$0xff] %v712
      %v734 = vld [vmem:[%s392] sm:$0xff]
      %v735 = vld [vmem:[%s392 + $0x8] sm:$0xff]
      %v736 = vld [vmem:[%s392 + $0x10] sm:$0xff]
      %v737 = vld [vmem:[%s392 + $0x18] sm:$0xff]
      %v738 = vld [vmem:[%s392 + $0x20] sm:$0xff]
      %v739 = vld [vmem:[%s392 + $0x28] sm:$0xff]
      %v740 = vld [vmem:[%s392 + $0x30] sm:$0xff]
      %v741 = vld [vmem:[%s392 + $0x38] sm:$0xff]
      %v742 = vld [vmem:[%s392 + $0x40] sm:$0xff]
      %v743 = vld [vmem:[%s392 + $0x48] sm:$0xff]
      %744 = vst [vmem:[#allocation2 + $0x140] sm:$0xff] %v734
      %745 = vst [vmem:[#allocation2 + $0x148] sm:$0xff] %v735
      %746 = vst [vmem:[#allocation2 + $0x150] sm:$0xff] %v736
      %747 = vst [vmem:[#allocation2 + $0x158] sm:$0xff] %v737
      %748 = vst [vmem:[#allocation2 + $0x160] sm:$0xff] %v738
      %749 = vst [vmem:[#allocation2 + $0x168] sm:$0xff] %v739
      %750 = vst [vmem:[#allocation2 + $0x170] sm:$0xff] %v740
      %751 = vst [vmem:[#allocation2 + $0x178] sm:$0xff] %v741
      %752 = vst [vmem:[#allocation2 + $0x180] sm:$0xff] %v742
      %753 = vst [vmem:[#allocation2 + $0x188] sm:$0xff] %v743
      %v754 = vld [vmem:[%s392] sm:$0xff]
      %v755 = vld [vmem:[%s392 + $0x8] sm:$0xff]
      %v756 = vld [vmem:[%s392 + $0x10] sm:$0xff]
      %v757 = vld [vmem:[%s392 + $0x18] sm:$0xff]
      %v758 = vld [vmem:[%s392 + $0x20] sm:$0xff]
      %v759 = vld [vmem:[%s392 + $0x28] sm:$0xff]
      %v760 = vld [vmem:[%s392 + $0x30] sm:$0xff]
      %v761 = vld [vmem:[%s392 + $0x38] sm:$0xff]
      %v762 = vld [vmem:[%s392 + $0x40] sm:$0xff]
      %v763 = vld [vmem:[%s392 + $0x48] sm:$0xff]
      %774 = vrot.lane.b32.xlu0 %v754, 127
      %v775 = vpop.permute.xlu0 %774
      %776 = vrot.lane.b32.xlu0 %v755, 127
      %v777 = vpop.permute.xlu0 %776
      %778 = vrot.lane.b32.xlu0 %v756, 127
      %v779 = vpop.permute.xlu0 %778
      %780 = vrot.lane.b32.xlu0 %v757, 127
      %v781 = vpop.permute.xlu0 %780
      %782 = vrot.lane.b32.xlu0 %v758, 127
      %v783 = vpop.permute.xlu0 %782
      %784 = vrot.lane.b32.xlu0 %v759, 127
      %v785 = vpop.permute.xlu0 %784
      %786 = vrot.lane.b32.xlu0 %v760, 127
      %v787 = vpop.permute.xlu0 %786
      %788 = vrot.lane.b32.xlu0 %v761, 127
      %v789 = vpop.permute.xlu0 %788
      %790 = vrot.lane.b32.xlu0 %v762, 127
      %v791 = vpop.permute.xlu0 %790
      %792 = vrot.lane.b32.xlu0 %v763, 127
      %v793 = vpop.permute.xlu0 %792
      %vm794 = vcmask 1039360
      %v795 = vsel %vm794, %v775, %v777
      %v796 = vsel %vm794, %v777, %v779
      %v797 = vsel %vm794, %v779, %v781
      %v798 = vsel %vm794, %v781, %v783
      %v799 = vsel %vm794, %v783, %v785
      %v800 = vsel %vm794, %v785, %v787
      %v801 = vsel %vm794, %v787, %v789
      %v802 = vsel %vm794, %v789, %v791
      %v803 = vsel %vm794, %v791, %v793
      %814 = vst [vmem:[#allocation2 + $0x190] sm:$0xff] %v795
      %815 = vst [vmem:[#allocation2 + $0x198] sm:$0xff] %v796
      %816 = vst [vmem:[#allocation2 + $0x1a0] sm:$0xff] %v797
      %817 = vst [vmem:[#allocation2 + $0x1a8] sm:$0xff] %v798
      %818 = vst [vmem:[#allocation2 + $0x1b0] sm:$0xff] %v799
      %819 = vst [vmem:[#allocation2 + $0x1b8] sm:$0xff] %v800
      %820 = vst [vmem:[#allocation2 + $0x1c0] sm:$0xff] %v801
      %821 = vst [vmem:[#allocation2 + $0x1c8] sm:$0xff] %v802
      %822 = vst [vmem:[#allocation2 + $0x1d0] sm:$0xff] %v803
      %823 = vst.msk [vmem:[#allocation2 + $0x1d8] sm:$0xff] %vm794, %v793
      %v824 = vld [vmem:[%s404] sm:$0xff]
      %826 = vrot.lane.b32.xlu0 %v824, 127
      %v827 = vpop.permute.xlu0 %826
      %vm829 = vcmask 1048568
      %830 = vst.msk [vmem:[#allocation2 + $0x1d8] sm:$0xff] %vm829, %v827
      %v831 = vld [vmem:[%s392] sm:$0xff]
      %v832 = vld [vmem:[%s392 + $0x8] sm:$0xff]
      %v833 = vld [vmem:[%s392 + $0x10] sm:$0xff]
      %v834 = vld [vmem:[%s392 + $0x18] sm:$0xff]
      %v835 = vld [vmem:[%s392 + $0x20] sm:$0xff]
      %v836 = vld [vmem:[%s392 + $0x28] sm:$0xff]
      %v837 = vld [vmem:[%s392 + $0x30] sm:$0xff]
      %v838 = vld [vmem:[%s392 + $0x38] sm:$0xff]
      %v839 = vld [vmem:[%s392 + $0x40] sm:$0xff]
      %v840 = vld [vmem:[%s392 + $0x48] sm:$0xff]
      %851 = vrot.lane.b32.xlu0 %v831, 95
      %v852 = vpop.permute.xlu0 %851
      %853 = vrot.lane.b32.xlu0 %v832, 95
      %v854 = vpop.permute.xlu0 %853
      %855 = vrot.lane.b32.xlu0 %v833, 95
      %v856 = vpop.permute.xlu0 %855
      %857 = vrot.lane.b32.xlu0 %v834, 95
      %v858 = vpop.permute.xlu0 %857
      %859 = vrot.lane.b32.xlu0 %v835, 95
      %v860 = vpop.permute.xlu0 %859
      %861 = vrot.lane.b32.xlu0 %v836, 95
      %v862 = vpop.permute.xlu0 %861
      %863 = vrot.lane.b32.xlu0 %v837, 95
      %v864 = vpop.permute.xlu0 %863
      %865 = vrot.lane.b32.xlu0 %v838, 95
      %v866 = vpop.permute.xlu0 %865
      %867 = vrot.lane.b32.xlu0 %v839, 95
      %v868 = vpop.permute.xlu0 %867
      %869 = vrot.lane.b32.xlu0 %v840, 95
      %v870 = vpop.permute.xlu0 %869
      %vm871 = vcmask 777216
      %v872 = vsel %vm871, %v852, %v854
      %v873 = vsel %vm871, %v854, %v856
      %v874 = vsel %vm871, %v856, %v858
      %v875 = vsel %vm871, %v858, %v860
      %v876 = vsel %vm871, %v860, %v862
      %v877 = vsel %vm871, %v862, %v864
      %v878 = vsel %vm871, %v864, %v866
      %v879 = vsel %vm871, %v866, %v868
      %v880 = vsel %vm871, %v868, %v870
      %891 = vst [vmem:[#allocation2 + $0x1e0] sm:$0xff] %v872
      %892 = vst [vmem:[#allocation2 + $0x1e8] sm:$0xff] %v873
      %893 = vst [vmem:[#allocation2 + $0x1f0] sm:$0xff] %v874
      %894 = vst [vmem:[#allocation2 + $0x1f8] sm:$0xff] %v875
      %895 = vst [vmem:[#allocation2 + $0x200] sm:$0xff] %v876
      %896 = vst [vmem:[#allocation2 + $0x208] sm:$0xff] %v877
      %897 = vst [vmem:[#allocation2 + $0x210] sm:$0xff] %v878
      %898 = vst [vmem:[#allocation2 + $0x218] sm:$0xff] %v879
      %899 = vst [vmem:[#allocation2 + $0x220] sm:$0xff] %v880
      %900 = vst.msk [vmem:[#allocation2 + $0x228] sm:$0xff] %vm871, %v870
      %v901 = vld [vmem:[%s404] sm:$0xff]
      %903 = vrot.lane.b32.xlu0 %v901, 95
      %v904 = vpop.permute.xlu0 %903
      %vm906 = vcmask 1048312
      %907 = vst.msk [vmem:[#allocation2 + $0x228] sm:$0xff] %vm906, %v904
      %v908 = vld [vmem:[%s392] sm:$0xff]
      %v909 = vld [vmem:[%s392 + $0x8] sm:$0xff]
      %v910 = vld [vmem:[%s392 + $0x10] sm:$0xff]
      %v911 = vld [vmem:[%s392 + $0x18] sm:$0xff]
      %v912 = vld [vmem:[%s392 + $0x20] sm:$0xff]
      %v913 = vld [vmem:[%s392 + $0x28] sm:$0xff]
      %v914 = vld [vmem:[%s392 + $0x30] sm:$0xff]
      %v915 = vld [vmem:[%s392 + $0x38] sm:$0xff]
      %v916 = vld [vmem:[%s392 + $0x40] sm:$0xff]
      %v917 = vld [vmem:[%s392 + $0x48] sm:$0xff]
      %928 = vrot.lane.b32.xlu0 %v908, 94
      %v929 = vpop.permute.xlu0 %928
      %930 = vrot.lane.b32.xlu0 %v909, 94
      %v931 = vpop.permute.xlu0 %930
      %932 = vrot.lane.b32.xlu0 %v910, 94
      %v933 = vpop.permute.xlu0 %932
      %934 = vrot.lane.b32.xlu0 %v911, 94
      %v935 = vpop.permute.xlu0 %934
      %936 = vrot.lane.b32.xlu0 %v912, 94
      %v937 = vpop.permute.xlu0 %936
      %938 = vrot.lane.b32.xlu0 %v913, 94
      %v939 = vpop.permute.xlu0 %938
      %940 = vrot.lane.b32.xlu0 %v914, 94
      %v941 = vpop.permute.xlu0 %940
      %942 = vrot.lane.b32.xlu0 %v915, 94
      %v943 = vpop.permute.xlu0 %942
      %944 = vrot.lane.b32.xlu0 %v916, 94
      %v945 = vpop.permute.xlu0 %944
      %946 = vrot.lane.b32.xlu0 %v917, 94
      %v947 = vpop.permute.xlu0 %946
      %vm948 = vcmask 769024
      %v949 = vsel %vm948, %v929, %v931
      %v950 = vsel %vm948, %v931, %v933
      %v951 = vsel %vm948, %v933, %v935
      %v952 = vsel %vm948, %v935, %v937
      %v953 = vsel %vm948, %v937, %v939
      %v954 = vsel %vm948, %v939, %v941
      %v955 = vsel %vm948, %v941, %v943
      %v956 = vsel %vm948, %v943, %v945
      %v957 = vsel %vm948, %v945, %v947
      %968 = vst [vmem:[#allocation2 + $0x230] sm:$0xff] %v949
      %969 = vst [vmem:[#allocation2 + $0x238] sm:$0xff] %v950
      %970 = vst [vmem:[#allocation2 + $0x240] sm:$0xff] %v951
      %971 = vst [vmem:[#allocation2 + $0x248] sm:$0xff] %v952
      %972 = vst [vmem:[#allocation2 + $0x250] sm:$0xff] %v953
      %973 = vst [vmem:[#allocation2 + $0x258] sm:$0xff] %v954
      %974 = vst [vmem:[#allocation2 + $0x260] sm:$0xff] %v955
      %975 = vst [vmem:[#allocation2 + $0x268] sm:$0xff] %v956
      %976 = vst [vmem:[#allocation2 + $0x270] sm:$0xff] %v957
      %977 = vst.msk [vmem:[#allocation2 + $0x278] sm:$0xff] %vm948, %v947
      %v978 = vld [vmem:[%s404] sm:$0xff]
      %980 = vrot.lane.b32.xlu0 %v978, 94
      %v981 = vpop.permute.xlu0 %980
      %vm983 = vcmask 1048304
      %984 = vst.msk [vmem:[#allocation2 + $0x278] sm:$0xff] %vm983, %v981
      %v985 = vld [vmem:[%s392] sm:$0xff]
      %v986 = vld [vmem:[%s392 + $0x8] sm:$0xff]
      %v987 = vld [vmem:[%s392 + $0x10] sm:$0xff]
      %v988 = vld [vmem:[%s392 + $0x18] sm:$0xff]
      %v989 = vld [vmem:[%s392 + $0x20] sm:$0xff]
      %v990 = vld [vmem:[%s392 + $0x28] sm:$0xff]
      %v991 = vld [vmem:[%s392 + $0x30] sm:$0xff]
      %v992 = vld [vmem:[%s392 + $0x38] sm:$0xff]
      %v993 = vld [vmem:[%s392 + $0x40] sm:$0xff]
      %v994 = vld [vmem:[%s392 + $0x48] sm:$0xff]
      %1005 = vrot.lane.b32.xlu0 %v985, 93
      %v1006 = vpop.permute.xlu0 %1005
      %1007 = vrot.lane.b32.xlu0 %v986, 93
      %v1008 = vpop.permute.xlu0 %1007
      %1009 = vrot.lane.b32.xlu0 %v987, 93
      %v1010 = vpop.permute.xlu0 %1009
      %1011 = vrot.lane.b32.xlu0 %v988, 93
      %v1012 = vpop.permute.xlu0 %1011
      %1013 = vrot.lane.b32.xlu0 %v989, 93
      %v1014 = vpop.permute.xlu0 %1013
      %1015 = vrot.lane.b32.xlu0 %v990, 93
      %v1016 = vpop.permute.xlu0 %1015
      %1017 = vrot.lane.b32.xlu0 %v991, 93
      %v1018 = vpop.permute.xlu0 %1017
      %1019 = vrot.lane.b32.xlu0 %v992, 93
      %v1020 = vpop.permute.xlu0 %1019
      %1021 = vrot.lane.b32.xlu0 %v993, 93
      %v1022 = vpop.permute.xlu0 %1021
      %1023 = vrot.lane.b32.xlu0 %v994, 93
      %v1024 = vpop.permute.xlu0 %1023
      %vm1025 = vcmask 760832
      %v1026 = vsel %vm1025, %v1006, %v1008
      %v1027 = vsel %vm1025, %v1008, %v1010
      %v1028 = vsel %vm1025, %v1010, %v1012
      %v1029 = vsel %vm1025, %v1012, %v1014
      %v1030 = vsel %vm1025, %v1014, %v1016
      %v1031 = vsel %vm1025, %v1016, %v1018
      %v1032 = vsel %vm1025, %v1018, %v1020
      %v1033 = vsel %vm1025, %v1020, %v1022
      %v1034 = vsel %vm1025, %v1022, %v1024
      %1045 = vst [vmem:[#allocation2 + $0x280] sm:$0xff] %v1026
      %1046 = vst [vmem:[#allocation2 + $0x288] sm:$0xff] %v1027
      %1047 = vst [vmem:[#allocation2 + $0x290] sm:$0xff] %v1028
      %1048 = vst [vmem:[#allocation2 + $0x298] sm:$0xff] %v1029
      %1049 = vst [vmem:[#allocation2 + $0x2a0] sm:$0xff] %v1030
      %1050 = vst [vmem:[#allocation2 + $0x2a8] sm:$0xff] %v1031
      %1051 = vst [vmem:[#allocation2 + $0x2b0] sm:$0xff] %v1032
      %1052 = vst [vmem:[#allocation2 + $0x2b8] sm:$0xff] %v1033
      %1053 = vst [vmem:[#allocation2 + $0x2c0] sm:$0xff] %v1034
      %1054 = vst.msk [vmem:[#allocation2 + $0x2c8] sm:$0xff] %vm1025, %v1024
      %v1055 = vld [vmem:[%s404] sm:$0xff]
      %1057 = vrot.lane.b32.xlu0 %v1055, 93
      %v1058 = vpop.permute.xlu0 %1057
      %vm1060 = vcmask 1048296
      %1061 = vst.msk [vmem:[#allocation2 + $0x2c8] sm:$0xff] %vm1060, %v1058
      %v1062 = vld [vmem:[%s3] sm:$0xff]
      %v1063 = vld [vmem:[#allocation2] sm:$0xff]
      %v1064 = vld [vmem:[#allocation2 + $0x8] sm:$0xff]
      %v1065 = vld [vmem:[#allocation2 + $0x10] sm:$0xff]
      %v1066 = vld [vmem:[#allocation2 + $0x18] sm:$0xff]
      %v1067 = vld [vmem:[#allocation2 + $0x20] sm:$0xff]
      %v1068 = vld [vmem:[#allocation2 + $0x28] sm:$0xff]
      %v1069 = vld [vmem:[#allocation2 + $0x30] sm:$0xff]
      %v1070 = vld [vmem:[#allocation2 + $0x38] sm:$0xff]
      %v1071 = vld [vmem:[#allocation2 + $0x40] sm:$0xff]
      %v1072 = vld [vmem:[#allocation2 + $0x48] sm:$0xff]
      %v1073 = vld [vmem:[#allocation2 + $0x50] sm:$0xff]
      %v1074 = vld [vmem:[#allocation2 + $0x58] sm:$0xff]
      %v1075 = vld [vmem:[#allocation2 + $0x60] sm:$0xff]
      %v1076 = vld [vmem:[#allocation2 + $0x68] sm:$0xff]
      %v1077 = vld [vmem:[#allocation2 + $0x70] sm:$0xff]
      %v1078 = vld [vmem:[#allocation2 + $0x78] sm:$0xff]
      %v1079 = vld [vmem:[#allocation2 + $0x80] sm:$0xff]
      %v1080 = vld [vmem:[#allocation2 + $0x88] sm:$0xff]
      %v1081 = vld [vmem:[#allocation2 + $0x90] sm:$0xff]
      %v1082 = vld [vmem:[#allocation2 + $0x98] sm:$0xff]
      %v1083 = vld [vmem:[#allocation2 + $0xa0] sm:$0xff]
      %v1084 = vld [vmem:[#allocation2 + $0xa8] sm:$0xff]
      %v1085 = vld [vmem:[#allocation2 + $0xb0] sm:$0xff]
      %v1086 = vld [vmem:[#allocation2 + $0xb8] sm:$0xff]
      %v1087 = vld [vmem:[#allocation2 + $0xc0] sm:$0xff]
      %v1088 = vld [vmem:[#allocation2 + $0xc8] sm:$0xff]
      %v1089 = vld [vmem:[#allocation2 + $0xd0] sm:$0xff]
      %v1090 = vld [vmem:[#allocation2 + $0xd8] sm:$0xff]
      %v1091 = vld [vmem:[#allocation2 + $0xe0] sm:$0xff]
      %v1092 = vld [vmem:[#allocation2 + $0xe8] sm:$0xff]
      %v1093 = vld [vmem:[#allocation2 + $0xf0] sm:$0xff]
      %v1094 = vld [vmem:[#allocation2 + $0xf8] sm:$0xff]
      %v1095 = vld [vmem:[#allocation2 + $0x100] sm:$0xff]
      %v1096 = vld [vmem:[#allocation2 + $0x108] sm:$0xff]
      %v1097 = vld [vmem:[#allocation2 + $0x110] sm:$0xff]
      %v1098 = vld [vmem:[#allocation2 + $0x118] sm:$0xff]
      %v1099 = vld [vmem:[#allocation2 + $0x120] sm:$0xff]
      %v1100 = vld [vmem:[#allocation2 + $0x128] sm:$0xff]
      %v1101 = vld [vmem:[#allocation2 + $0x130] sm:$0xff]
      %v1102 = vld [vmem:[#allocation2 + $0x138] sm:$0xff]
      %v1103 = vld [vmem:[#allocation2 + $0x140] sm:$0xff]
      %v1104 = vld [vmem:[#allocation2 + $0x148] sm:$0xff]
      %v1105 = vld [vmem:[#allocation2 + $0x150] sm:$0xff]
      %v1106 = vld [vmem:[#allocation2 + $0x158] sm:$0xff]
      %v1107 = vld [vmem:[#allocation2 + $0x160] sm:$0xff]
      %v1108 = vld [vmem:[#allocation2 + $0x168] sm:$0xff]
      %v1109 = vld [vmem:[#allocation2 + $0x170] sm:$0xff]
      %v1110 = vld [vmem:[#allocation2 + $0x178] sm:$0xff]
      %v1111 = vld [vmem:[#allocation2 + $0x180] sm:$0xff]
      %v1112 = vld [vmem:[#allocation2 + $0x188] sm:$0xff]
      %v1113 = vld [vmem:[#allocation2 + $0x190] sm:$0xff]
      %v1114 = vld [vmem:[#allocation2 + $0x198] sm:$0xff]
      %v1115 = vld [vmem:[#allocation2 + $0x1a0] sm:$0xff]
      %v1116 = vld [vmem:[#allocation2 + $0x1a8] sm:$0xff]
      %v1117 = vld [vmem:[#allocation2 + $0x1b0] sm:$0xff]
      %v1118 = vld [vmem:[#allocation2 + $0x1b8] sm:$0xff]
      %v1119 = vld [vmem:[#allocation2 + $0x1c0] sm:$0xff]
      %v1120 = vld [vmem:[#allocation2 + $0x1c8] sm:$0xff]
      %v1121 = vld [vmem:[#allocation2 + $0x1d0] sm:$0xff]
      %v1122 = vld [vmem:[#allocation2 + $0x1d8] sm:$0xff]
      %v1123 = vld [vmem:[#allocation2 + $0x1e0] sm:$0xff]
      %v1124 = vld [vmem:[#allocation2 + $0x1e8] sm:$0xff]
      %v1125 = vld [vmem:[#allocation2 + $0x1f0] sm:$0xff]
      %v1126 = vld [vmem:[#allocation2 + $0x1f8] sm:$0xff]
      %v1127 = vld [vmem:[#allocation2 + $0x200] sm:$0xff]
      %v1128 = vld [vmem:[#allocation2 + $0x208] sm:$0xff]
      %v1129 = vld [vmem:[#allocation2 + $0x210] sm:$0xff]
      %v1130 = vld [vmem:[#allocation2 + $0x218] sm:$0xff]
      %v1131 = vld [vmem:[#allocation2 + $0x220] sm:$0xff]
      %v1132 = vld [vmem:[#allocation2 + $0x228] sm:$0xff]
      %v1133 = vld [vmem:[#allocation2 + $0x230] sm:$0xff]
      %v1134 = vld [vmem:[#allocation2 + $0x238] sm:$0xff]
      %v1135 = vld [vmem:[#allocation2 + $0x240] sm:$0xff]
      %v1136 = vld [vmem:[#allocation2 + $0x248] sm:$0xff]
      %v1137 = vld [vmem:[#allocation2 + $0x250] sm:$0xff]
      %v1138 = vld [vmem:[#allocation2 + $0x258] sm:$0xff]
      %v1139 = vld [vmem:[#allocation2 + $0x260] sm:$0xff]
      %v1140 = vld [vmem:[#allocation2 + $0x268] sm:$0xff]
      %v1141 = vld [vmem:[#allocation2 + $0x270] sm:$0xff]
      %v1142 = vld [vmem:[#allocation2 + $0x278] sm:$0xff]
      %v1143 = vld [vmem:[#allocation2 + $0x280] sm:$0xff]
      %v1144 = vld [vmem:[#allocation2 + $0x288] sm:$0xff]
      %v1145 = vld [vmem:[#allocation2 + $0x290] sm:$0xff]
      %v1146 = vld [vmem:[#allocation2 + $0x298] sm:$0xff]
      %v1147 = vld [vmem:[#allocation2 + $0x2a0] sm:$0xff]
      %v1148 = vld [vmem:[#allocation2 + $0x2a8] sm:$0xff]
      %v1149 = vld [vmem:[#allocation2 + $0x2b0] sm:$0xff]
      %v1150 = vld [vmem:[#allocation2 + $0x2b8] sm:$0xff]
      %v1151 = vld [vmem:[#allocation2 + $0x2c0] sm:$0xff]
      %v1152 = vld [vmem:[#allocation2 + $0x2c8] sm:$0xff]
      %v1153 = vld [vmem:[%s4] sm:$0xff]
      %1155 = vset.pattern.permute.xlu0 0
      %1156 = vperm.xlu0 %1155, %v1153
      %v1157 = vpop.permute.xlu0 %1156
      %vm1159 = vcmask 588800
      %v1161 = vsel %vm1159, %v1062, 0
      %1163 = vmatpush.msra.mxu0 0.0
      %1164 = vmatpush.msra.mxu0 0.0
      %1165 = vmatpush.msra.mxu0 0.0
      %1166 = vmatpush.msra.mxu0 0.0
      %1167 = vmatpush.msra.mxu0 0.0
      %1168 = vmatpush.msra.mxu0 0.0
      %1169 = vmatpush.msra.mxu0 0.0
      %1170 = vmatpush.msra.mxu0 %v1143
      %1171 = vmatpush.msra.mxu0 %v1133
      %1172 = vmatpush.msra.mxu0 %v1123
      %1173 = vmatpush.msra.mxu0 %v1113
      %1174 = vmatpush.msra.mxu0 %v1103
      %1175 = vmatpush.msra.mxu0 %v1093
      %1176 = vmatpush.msra.mxu0 %v1083
      %1177 = vmatpush.msra.mxu0 %v1073
      %1178 = vmatpush.msra.mxu0 %v1063
      %1179 = vmatmul.f32.gmra.mxu0 %v1161
      %v1180 = vpop.f32.mrf.mxu0
      %v1181 = vadd.f32 %v1157, %v1180
      %1182 = vdwg.mxu0
      %1183 = vmatpush.msra.mxu0 0.0
      %1184 = vmatpush.msra.mxu0 0.0
      %1185 = vmatpush.msra.mxu0 0.0
      %1186 = vmatpush.msra.mxu0 0.0
      %1187 = vmatpush.msra.mxu0 0.0
      %1188 = vmatpush.msra.mxu0 0.0
      %1189 = vmatpush.msra.mxu0 0.0
      %1190 = vmatpush.msra.mxu0 %v1144
      %1191 = vmatpush.msra.mxu0 %v1134
      %1192 = vmatpush.msra.mxu0 %v1124
      %1193 = vmatpush.msra.mxu0 %v1114
      %1194 = vmatpush.msra.mxu0 %v1104
      %1195 = vmatpush.msra.mxu0 %v1094
      %1196 = vmatpush.msra.mxu0 %v1084
      %1197 = vmatpush.msra.mxu0 %v1074
      %1198 = vmatpush.msra.mxu0 %v1064
      %1199 = vmatmul.f32.gmra.mxu0 %v1161
      %v1200 = vpop.f32.mrf.mxu0
      %v1201 = vadd.f32 %v1157, %v1200
      %1202 = vdwg.mxu0
      %1203 = vmatpush.msra.mxu0 0.0
      %1204 = vmatpush.msra.mxu0 0.0
      %1205 = vmatpush.msra.mxu0 0.0
      %1206 = vmatpush.msra.mxu0 0.0
      %1207 = vmatpush.msra.mxu0 0.0
      %1208 = vmatpush.msra.mxu0 0.0
      %1209 = vmatpush.msra.mxu0 0.0
      %1210 = vmatpush.msra.mxu0 %v1145
      %1211 = vmatpush.msra.mxu0 %v1135
      %1212 = vmatpush.msra.mxu0 %v1125
      %1213 = vmatpush.msra.mxu0 %v1115
      %1214 = vmatpush.msra.mxu0 %v1105
      %1215 = vmatpush.msra.mxu0 %v1095
      %1216 = vmatpush.msra.mxu0 %v1085
      %1217 = vmatpush.msra.mxu0 %v1075
      %1218 = vmatpush.msra.mxu0 %v1065
      %1219 = vmatmul.f32.gmra.mxu0 %v1161
      %v1220 = vpop.f32.mrf.mxu0
      %v1221 = vadd.f32 %v1157, %v1220
      %1222 = vdwg.mxu0
      %1223 = vmatpush.msra.mxu0 0.0
      %1224 = vmatpush.msra.mxu0 0.0
      %1225 = vmatpush.msra.mxu0 0.0
      %1226 = vmatpush.msra.mxu0 0.0
      %1227 = vmatpush.msra.mxu0 0.0
      %1228 = vmatpush.msra.mxu0 0.0
      %1229 = vmatpush.msra.mxu0 0.0
      %1230 = vmatpush.msra.mxu0 %v1146
      %1231 = vmatpush.msra.mxu0 %v1136
      %1232 = vmatpush.msra.mxu0 %v1126
      %1233 = vmatpush.msra.mxu0 %v1116
      %1234 = vmatpush.msra.mxu0 %v1106
      %1235 = vmatpush.msra.mxu0 %v1096
      %1236 = vmatpush.msra.mxu0 %v1086
      %1237 = vmatpush.msra.mxu0 %v1076
      %1238 = vmatpush.msra.mxu0 %v1066
      %1239 = vmatmul.f32.gmra.mxu0 %v1161
      %v1240 = vpop.f32.mrf.mxu0
      %v1241 = vadd.f32 %v1157, %v1240
      %1242 = vdwg.mxu0
      %1243 = vmatpush.msra.mxu0 0.0
      %1244 = vmatpush.msra.mxu0 0.0
      %1245 = vmatpush.msra.mxu0 0.0
      %1246 = vmatpush.msra.mxu0 0.0
      %1247 = vmatpush.msra.mxu0 0.0
      %1248 = vmatpush.msra.mxu0 0.0
      %1249 = vmatpush.msra.mxu0 0.0
      %1250 = vmatpush.msra.mxu0 %v1147
      %1251 = vmatpush.msra.mxu0 %v1137
      %1252 = vmatpush.msra.mxu0 %v1127
      %1253 = vmatpush.msra.mxu0 %v1117
      %1254 = vmatpush.msra.mxu0 %v1107
      %1255 = vmatpush.msra.mxu0 %v1097
      %1256 = vmatpush.msra.mxu0 %v1087
      %1257 = vmatpush.msra.mxu0 %v1077
      %1258 = vmatpush.msra.mxu0 %v1067
      %1259 = vmatmul.f32.gmra.mxu0 %v1161
      %v1260 = vpop.f32.mrf.mxu0
      %v1261 = vadd.f32 %v1157, %v1260
      %1262 = vdwg.mxu0
      %1263 = vmatpush.msra.mxu0 0.0
      %1264 = vmatpush.msra.mxu0 0.0
      %1265 = vmatpush.msra.mxu0 0.0
      %1266 = vmatpush.msra.mxu0 0.0
      %1267 = vmatpush.msra.mxu0 0.0
      %1268 = vmatpush.msra.mxu0 0.0
      %1269 = vmatpush.msra.mxu0 0.0
      %1270 = vmatpush.msra.mxu0 %v1148
      %1271 = vmatpush.msra.mxu0 %v1138
      %1272 = vmatpush.msra.mxu0 %v1128
      %1273 = vmatpush.msra.mxu0 %v1118
      %1274 = vmatpush.msra.mxu0 %v1108
      %1275 = vmatpush.msra.mxu0 %v1098
      %1276 = vmatpush.msra.mxu0 %v1088
      %1277 = vmatpush.msra.mxu0 %v1078
      %1278 = vmatpush.msra.mxu0 %v1068
      %1279 = vmatmul.f32.gmra.mxu0 %v1161
      %v1280 = vpop.f32.mrf.mxu0
      %v1281 = vadd.f32 %v1157, %v1280
      %1282 = vdwg.mxu0
      %1283 = vmatpush.msra.mxu0 0.0
      %1284 = vmatpush.msra.mxu0 0.0
      %1285 = vmatpush.msra.mxu0 0.0
      %1286 = vmatpush.msra.mxu0 0.0
      %1287 = vmatpush.msra.mxu0 0.0
      %1288 = vmatpush.msra.mxu0 0.0
      %1289 = vmatpush.msra.mxu0 0.0
      %1290 = vmatpush.msra.mxu0 %v1149
      %1291 = vmatpush.msra.mxu0 %v1139
      %1292 = vmatpush.msra.mxu0 %v1129
      %1293 = vmatpush.msra.mxu0 %v1119
      %1294 = vmatpush.msra.mxu0 %v1109
      %1295 = vmatpush.msra.mxu0 %v1099
      %1296 = vmatpush.msra.mxu0 %v1089
      %1297 = vmatpush.msra.mxu0 %v1079
      %1298 = vmatpush.msra.mxu0 %v1069
      %1299 = vmatmul.f32.gmra.mxu0 %v1161
      %v1300 = vpop.f32.mrf.mxu0
      %v1301 = vadd.f32 %v1157, %v1300
      %1302 = vdwg.mxu0
      %1303 = vmatpush.msra.mxu0 0.0
      %1304 = vmatpush.msra.mxu0 0.0
      %1305 = vmatpush.msra.mxu0 0.0
      %1306 = vmatpush.msra.mxu0 0.0
      %1307 = vmatpush.msra.mxu0 0.0
      %1308 = vmatpush.msra.mxu0 0.0
      %1309 = vmatpush.msra.mxu0 0.0
      %1310 = vmatpush.msra.mxu0 %v1150
      %1311 = vmatpush.msra.mxu0 %v1140
      %1312 = vmatpush.msra.mxu0 %v1130
      %1313 = vmatpush.msra.mxu0 %v1120
      %1314 = vmatpush.msra.mxu0 %v1110
      %1315 = vmatpush.msra.mxu0 %v1100
      %1316 = vmatpush.msra.mxu0 %v1090
      %1317 = vmatpush.msra.mxu0 %v1080
      %1318 = vmatpush.msra.mxu0 %v1070
      %1319 = vmatmul.f32.gmra.mxu0 %v1161
      %v1320 = vpop.f32.mrf.mxu0
      %v1321 = vadd.f32 %v1157, %v1320
      %1322 = vdwg.mxu0
      %1323 = vmatpush.msra.mxu0 0.0
      %1324 = vmatpush.msra.mxu0 0.0
      %1325 = vmatpush.msra.mxu0 0.0
      %1326 = vmatpush.msra.mxu0 0.0
      %1327 = vmatpush.msra.mxu0 0.0
      %1328 = vmatpush.msra.mxu0 0.0
      %1329 = vmatpush.msra.mxu0 0.0
      %1330 = vmatpush.msra.mxu0 %v1151
      %1331 = vmatpush.msra.mxu0 %v1141
      %1332 = vmatpush.msra.mxu0 %v1131
      %1333 = vmatpush.msra.mxu0 %v1121
      %1334 = vmatpush.msra.mxu0 %v1111
      %1335 = vmatpush.msra.mxu0 %v1101
      %1336 = vmatpush.msra.mxu0 %v1091
      %1337 = vmatpush.msra.mxu0 %v1081
      %1338 = vmatpush.msra.mxu0 %v1071
      %1339 = vmatmul.f32.gmra.mxu0 %v1161
      %v1340 = vpop.f32.mrf.mxu0
      %v1341 = vadd.f32 %v1157, %v1340
      %1342 = vdwg.mxu0
      %1343 = vmatpush.msra.mxu0 0.0
      %1344 = vmatpush.msra.mxu0 0.0
      %1345 = vmatpush.msra.mxu0 0.0
      %1346 = vmatpush.msra.mxu0 0.0
      %1347 = vmatpush.msra.mxu0 0.0
      %1348 = vmatpush.msra.mxu0 0.0
      %1349 = vmatpush.msra.mxu0 0.0
      %1350 = vmatpush.msra.mxu0 %v1152
      %1351 = vmatpush.msra.mxu0 %v1142
      %1352 = vmatpush.msra.mxu0 %v1132
      %1353 = vmatpush.msra.mxu0 %v1122
      %1354 = vmatpush.msra.mxu0 %v1112
      %1355 = vmatpush.msra.mxu0 %v1102
      %1356 = vmatpush.msra.mxu0 %v1092
      %1357 = vmatpush.msra.mxu0 %v1082
      %1358 = vmatpush.msra.mxu0 %v1072
      %1359 = vmatmul.f32.gmra.mxu0 %v1161
      %v1360 = vpop.f32.mrf.mxu0
      %v1361 = vadd.f32 %v1157, %v1360
      %1362 = vdwg.mxu0
      %v1363 = vmax.f32 %v1181, 0.0
      %v1364 = vmax.f32 %v1201, 0.0
      %v1365 = vmax.f32 %v1221, 0.0
      %v1366 = vmax.f32 %v1241, 0.0
      %v1367 = vmax.f32 %v1261, 0.0
      %v1368 = vmax.f32 %v1281, 0.0
      %v1369 = vmax.f32 %v1301, 0.0
      %v1370 = vmax.f32 %v1321, 0.0
      %v1371 = vmax.f32 %v1341, 0.0
      %v1372 = vmax.f32 %v1361, 0.0
      %v1373 = vld [vmem:[%s411] sm:$0xff]
      %v1374 = vld [vmem:[%s411 + $0x8] sm:$0x3]
      %v1377 = vperm.slane %v1373, 0
      %v1378 = vperm.slane %v1373, 1
      %v1379 = vperm.slane %v1373, 2
      %v1380 = vperm.slane %v1373, 3
      %v1381 = vperm.slane %v1373, 4
      %v1382 = vperm.slane %v1373, 5
      %v1383 = vperm.slane %v1373, 6
      %v1384 = vperm.slane %v1373, 7
      %v1385 = vperm.slane %v1374, 0
      %v1386 = vperm.slane %v1374, 1
      %v1397 = vmul.f32 %v1363, %v1377
      %v1398 = vmul.f32 %v1364, %v1378
      %v1399 = vmul.f32 %v1365, %v1379
      %v1400 = vmul.f32 %v1366, %v1380
      %v1401 = vmul.f32 %v1367, %v1381
      %v1402 = vmul.f32 %v1368, %v1382
      %v1403 = vmul.f32 %v1369, %v1383
      %v1404 = vmul.f32 %v1370, %v1384
      %v1405 = vmul.f32 %v1371, %v1385
      %v1406 = vmul.f32 %v1372, %v1386
      %1407 = vst [vmem:[%s423] sm:$0xff] %v1397
      %1408 = vst [vmem:[%s423 + $0x8] sm:$0xff] %v1398
      %1409 = vst [vmem:[%s423 + $0x10] sm:$0xff] %v1399
      %1410 = vst [vmem:[%s423 + $0x18] sm:$0xff] %v1400
      %1411 = vst [vmem:[%s423 + $0x20] sm:$0xff] %v1401
      %1412 = vst [vmem:[%s423 + $0x28] sm:$0xff] %v1402
      %1413 = vst [vmem:[%s423 + $0x30] sm:$0xff] %v1403
      %1414 = vst [vmem:[%s423 + $0x38] sm:$0xff] %v1404
      %1415 = vst [vmem:[%s423 + $0x40] sm:$0xff] %v1405
      %1416 = vst [vmem:[%s423 + $0x48] sm:$0xff] %v1406
      %s1417 = sadd.s32 %s22, 1
      %s1418 = smul.u32 10, %s1417
      %p1419 = scmp.lt.s32.totalorder %s21, 1
      %s1420 = scalar_select %p1419, %s21, 1
      %p1421 = scmp.lt.s32.totalorder %s1418, 29
      %s1422 = scalar_select %p1421, %s1418, 29
      %s1423 = smul.addr %s1420, 30
      %s1424 = sadd.s32 %s1422, %s1423
      %s1425 = smul.addr %s1424, 8
      %s1426 = scalar_lea.vmem %s6, %s1425
      // Predicated region
      $region45: #{decoder_block_forward.2} parent=43 // pred_check
        %p1427 = pneg %p217
      $region46: #{decoder_block_forward.2} parent=43 // pred_check_branch
        %1429 = sbr.rel (%p1427) target = $region48
      $region47: #{decoder_block_forward.2} parent=43 // pred_region
        %s1430 = sadd.s32 %s22, 1
        %s1431 = smul.u32 10, %s1430
      $region48: #{decoder_block_forward.2} parent=43 // pred_fallthru
        _
    $region44: #{decoder_block_forward.2} parent=5 // pred_fallthru
      _
    %p1432 = scmp.le.s32.totalorder 2, %s12
    // Predicated region
    $region49: #{decoder_block_forward.2} parent=5 // pred_check
      %p1433 = pneg %p1432
    $region50: #{decoder_block_forward.2} parent=5 // pred_check_branch
      %1435 = sbr.rel (%p1433) target = $region52
    $region51: #{decoder_block_forward.2} parent=5 // pred_region
      %s1436 = ssub.s32 %s12, 2
      // Predicated region
      $region53: #{decoder_block_forward.2} parent=51 // pred_check
        %p1437 = pneg %p223
      $region54: #{decoder_block_forward.2} parent=51 // pred_check_branch
        %1439 = sbr.rel (%p1437) target = $region56
      $region55: #{decoder_block_forward.2} parent=51 // pred_region
        %s1440 = sadd.s32 %s24, 1
        %s1441 = smul.u32 10, %s1440
        %p1442 = scmp.lt.s32.totalorder %s23, 1
        %s1443 = scalar_select %p1442, %s23, 1
        %p1444 = scmp.lt.s32.totalorder %s1441, 29
        %s1445 = scalar_select %p1444, %s1441, 29
        %s1446 = smul.addr %s1443, 30
        %s1447 = sadd.s32 %s1445, %s1446
        %s1448 = smul.addr %s1447, 8
        %s1449 = scalar_lea.vmem %s6, %s1448
      $region56: #{decoder_block_forward.2} parent=51 // pred_fallthru
        _
    $region52: #{decoder_block_forward.2} parent=5 // pred_fallthru
      _
  $region6: #{decoder_block_forward.2} parent=0 // loop_footer
    %s16 = sadd.s32 1, %s12
  $region7: #{decoder_block_forward.2} parent=0 // loop_footer_branch
    %11 = sbr.rel target = $region3
  $region8: #{decoder_block_forward.2} parent=0 // loop_exit
    _

</llo_original>
